<compile_context>
chip_gen: v7x
topology: tpu7x:2x2x1
jax: 0.10.0
libtpu: 0.0.40
codegen_flags: <defaults>
</compile_context>

<pallas_src>
import functools

import jax
import jax.numpy as jnp
from jax.experimental import pallas as pl
from jax.experimental.pallas import tpu as pltpu

# ----------------------------- problem sizes (small, deterministic) -----------------
B = 4            # batch
T = 8            # max sequence length
I = 8            # input_size
H = 32           # hidden_size
F = 8            # feature_dim (zerofeatures)
O = 4            # output_size
NUM_LAYERS = 2
BN_EPS = 1e-5

# ----------------------------- packed-slab row layout --------------------------------
ROW_B0 = 0       # fused layer-0 bias, 4H lanes
ROW_B1 = 1       # fused layer-1 bias, 4H lanes
ROW_GAMMA = 2    # bn gamma, H lanes
ROW_BETA = 3     # bn beta,  H lanes
ROW_BFC = 4      # fc bias,  O lanes
ROW_LEN = 8      # lengths as f32, one per row, lane 0 (rows ROW_LEN : ROW_LEN+B)
ROW_ZF = 16      # zerofeatures, rows ROW_ZF : ROW_ZF+B, lanes 0:F
ROW_WFC = 24     # fc weight, rows ROW_WFC : ROW_WFC+H+F, lanes 0:O


# ----------------------------- Pallas kernel ----------------------------------------
def zerogru_kernel(x_ref, w0_ref, w1_ref, slab_ref, out_ref, *,
                   hidden, feat_dim, out_dim, eps):
    batch = x_ref.shape[0]
    seq_len = x_ref.shape[1]
    h = hidden

    def cell(inp, h_prev, w_ref, bias_row):
        # Weights / bias are read from their refs per call (NOT hoisted across the
        # unrolled loop) so the register allocator may reload from VMEM (3 vld/cycle,
        # hidden under the matmul) instead of pinning vregs and spilling.
        g = jnp.dot(inp, w_ref[...], preferred_element_type=jnp.float32) \
            + slab_ref[bias_row:bias_row + 1, 0:4 * h]               # (B, 4H) one vreg wide
        # Pre-summed layout: columns [r | z | n_x | n_h]
        r = jax.nn.sigmoid(g[:, 0:h])
        z = jax.nn.sigmoid(g[:, h:2 * h])
        n = jnp.tanh(g[:, 2 * h:3 * h] + r * g[:, 3 * h:4 * h])
        return (1.0 - z) * n + z * h_prev

    lens = slab_ref[ROW_LEN:ROW_LEN + batch, 0:1]                    # (B, 1) lengths (f32)

    h0 = jnp.zeros((batch, h), jnp.float32)
    h1 = jnp.zeros((batch, h), jnp.float32)

    # Statically unrolled recurrence: no per-step grid/pipeline overhead, full
    # scheduler visibility across the 2*T cells.
    for t in range(seq_len):
        valid = t < lens                                             # (B, 1) freeze mask
        x_t = x_ref[:, t, :]                                         # (B, I), static slice

        # Recurrent state at lane 0; the static x_t takes the lane shift (off-chain).
        h0_new = cell(jnp.concatenate([h0, x_t], axis=1), h0, w0_ref, ROW_B0)
        h0 = jnp.where(valid, h0_new, h0)

        h1_new = cell(jnp.concatenate([h1, h0], axis=1), h1, w1_ref, ROW_B1)
        h1 = jnp.where(valid, h1_new, h1)

    # h1 == hidden[-1] of the packed GRU (frozen at each sequence's last valid step).
    # BatchNorm1d, training-mode batch statistics (biased variance), affine.
    mean = jnp.mean(h1, axis=0, keepdims=True)
    var = jnp.mean((h1 - mean) ** 2, axis=0, keepdims=True)
    gamma = slab_ref[ROW_GAMMA:ROW_GAMMA + 1, 0:h]
    beta = slab_ref[ROW_BETA:ROW_BETA + 1, 0:h]
    gru_feat = (h1 - mean) * jax.lax.rsqrt(var + eps) * gamma + beta

    # fc(cat([gru_feat, zerofeatures], dim=1)) as two tiny concat-free matmuls.
    zf = slab_ref[ROW_ZF:ROW_ZF + batch, 0:feat_dim]
    w_fc_h = slab_ref[ROW_WFC:ROW_WFC + h, 0:out_dim]
    w_fc_z = slab_ref[ROW_WFC + h:ROW_WFC + h + feat_dim, 0:out_dim]
    b_fc = slab_ref[ROW_BFC:ROW_BFC + 1, 0:out_dim]
    out = jnp.dot(gru_feat, w_fc_h, preferred_element_type=jnp.float32) \
        + jnp.dot(zf, w_fc_z, preferred_element_type=jnp.float32) + b_fc
    out_ref[...] = out.astype(out_ref.dtype)


# ----------------------------- wrapper -----------------------------------------------
def _fuse_4h(w_ih, w_hh, b_ih, b_hh):
    """Pre-summed 4H-column layout. Rows: [h (H) ; x (din_x)]. Cols: [r | z | n_x | n_h].

    r,z W_hh rows share columns with the W_ih rows (gx+gh folded into the matmul);
    n keeps separate x-only (n_x) and h-only (n_h) column blocks.  Only the r/z biases
    may be pre-summed; b_ih_n and b_hh_n stay separate.
    """
    din_x, h3 = w_ih.shape
    h = w_hh.shape[0]
    w = jnp.zeros((h + din_x, 4 * h), jnp.float32)
    # h rows (recurrent state at leading lanes of the cell input)
    w = w.at[:h, 0:h].set(w_hh[:, 0:h])                  # r
    w = w.at[:h, h:2 * h].set(w_hh[:, h:2 * h])          # z
    w = w.at[:h, 3 * h:4 * h].set(w_hh[:, 2 * h:3 * h])  # n_h
    # x rows
    w = w.at[h:, 0:h].set(w_ih[:, 0:h])                  # r
    w = w.at[h:, h:2 * h].set(w_ih[:, h:2 * h])          # z
    w = w.at[h:, 2 * h:3 * h].set(w_ih[:, 2 * h:3 * h])  # n_x
    b = jnp.concatenate([
        b_ih[:, 0:h] + b_hh[:, 0:h],
        b_ih[:, h:2 * h] + b_hh[:, h:2 * h],
        b_ih[:, 2 * h:3 * h],          # b_ih_n
        b_hh[:, 2 * h:3 * h],          # b_hh_n
    ], axis=1)
    return w, b


def zero_gru_classifier(x, zerofeatures, lengths, params):
    """x: (B, T, I) batch-first (torch convention). Returns (B, output_size)."""
    b, t_len, i_dim = x.shape
    hidden = params["w_hh_l0"].shape[0]
    out_dim = params["b_fc"].shape[1]
    feat_dim = zerofeatures.shape[1]

    # One-time parameter re-layout outside the kernel.
    w0, b0 = _fuse_4h(params["w_ih_l0"], params["w_hh_l0"],
                      params["b_ih_l0"], params["b_hh_l0"])           # (H+I, 4H), (1, 4H)
    w1, b1 = _fuse_4h(params["w_ih_l1"], params["w_hh_l1"],
                      params["b_ih_l1"], params["b_hh_l1"])           # (2H, 4H), (1, 4H)

    # Pack every small operand into one slab -> a single prologue DMA instead of ~8.
    lanes = max(128, 4 * hidden)
    rows = ((ROW_WFC + hidden + feat_dim + 7) // 8) * 8
    assert ROW_LEN + b <= ROW_ZF and ROW_ZF + b <= ROW_WFC
    slab = jnp.zeros((rows, lanes), jnp.float32)
    slab = slab.at[ROW_B0, :4 * hidden].set(b0[0])
    slab = slab.at[ROW_B1, :4 * hidden].set(b1[0])
    slab = slab.at[ROW_GAMMA, :hidden].set(params["bn_gamma"][0])
    slab = slab.at[ROW_BETA, :hidden].set(params["bn_beta"][0])
    slab = slab.at[ROW_BFC, :out_dim].set(params["b_fc"][0])
    slab = slab.at[ROW_LEN:ROW_LEN + b, 0].set(lengths.astype(jnp.float32))
    slab = slab.at[ROW_ZF:ROW_ZF + b, :feat_dim].set(zerofeatures)
    slab = slab.at[ROW_WFC:ROW_WFC + hidden, :out_dim].set(params["w_fc_h"])
    slab = slab.at[ROW_WFC + hidden:ROW_WFC + hidden + feat_dim, :out_dim].set(params["w_fc_z"])

    vmem = pl.BlockSpec(memory_space=pltpu.MemorySpace.VMEM)
    kern = functools.partial(zerogru_kernel, hidden=hidden, feat_dim=feat_dim,
                             out_dim=out_dim, eps=BN_EPS)

    return pl.pallas_call(
        kern,
        out_shape=jax.ShapeDtypeStruct((b, out_dim), jnp.float32),
        in_specs=[vmem] * 4,
        out_specs=vmem,
    )(x, w0, w1, slab)


# ----------------------------- pure-JAX reference (unfused form) ---------------------
def _gru_cell_ref(x_t, h_prev, w_ih, w_hh, b_ih, b_hh, hidden):
    gx = jnp.dot(x_t, w_ih) + b_ih
    gh = jnp.dot(h_prev, w_hh) + b_hh
    r = jax.nn.sigmoid(gx[:, 0:hidden] + gh[:, 0:hidden])
    z = jax.nn.sigmoid(gx[:, hidden:2 * hidden] + gh[:, hidden:2 * hidden])
    n = jnp.tanh(gx[:, 2 * hidden:3 * hidden] + r * gh[:, 2 * hidden:3 * hidden])
    return (1.0 - z) * n + z * h_prev


def reference(x, zerofeatures, lengths, params):
    b, t_len, _ = x.shape

    def run_layer(inputs, w_ih, w_hh, b_ih, b_hh):
        def step(h, inp):
            xt, t = inp
            h_new = _gru_cell_ref(xt, h, w_ih, w_hh, b_ih, b_hh, H)
            m = (t < lengths)[:, None].astype(jnp.float32)
            h = m * h_new + (1.0 - m) * h
            return h, h

        h0 = jnp.zeros((b, H), jnp.float32)
        hT, hs = jax.lax.scan(step, h0, (jnp.swapaxes(inputs, 0, 1), jnp.arange(t_len)))
        return hT, jnp.swapaxes(hs, 0, 1)

    _, seq0 = run_layer(x, params["w_ih_l0"], params["w_hh_l0"],
                        params["b_ih_l0"], params["b_hh_l0"])
    h_last, _ = run_layer(seq0, params["w_ih_l1"], params["w_hh_l1"],
                          params["b_ih_l1"], params["b_hh_l1"])

    mean = jnp.mean(h_last, axis=0, keepdims=True)
    var = jnp.mean((h_last - mean) ** 2, axis=0, keepdims=True)
    gru_feat = (h_last - mean) * jax.lax.rsqrt(var + BN_EPS) * params["bn_gamma"] + params["bn_beta"]
    return (gru_feat @ params["w_fc_h"] + zerofeatures @ params["w_fc_z"] + params["b_fc"])


# ----------------------------- deterministic parameter init --------------------------
def init_params(key):
    keys = jax.random.split(key, 20)
    k = 1.0 / jnp.sqrt(H)
    u = lambda kk, shape: jax.random.uniform(kk, shape, jnp.float32, -k, k)
    return {
        # torch weight_ih_l0 is (3H, I); stored transposed (I, 3H). gate order r, z, n.
        "w_ih_l0": u(keys[0], (I, 3 * H)),
        "w_hh_l0": u(keys[1], (H, 3 * H)),
        "b_ih_l0": u(keys[2], (1, 3 * H)),
        "b_hh_l0": u(keys[3], (1, 3 * H)),
        "w_ih_l1": u(keys[4], (H, 3 * H)),
        "w_hh_l1": u(keys[5], (H, 3 * H)),
        "b_ih_l1": u(keys[6], (1, 3 * H)),
        "b_hh_l1": u(keys[7], (1, 3 * H)),
        # BatchNorm1d affine params (non-trivial so the BN path is exercised)
        "bn_gamma": jax.random.uniform(keys[8], (1, H), jnp.float32, 0.5, 1.5),
        "bn_beta": jax.random.uniform(keys[9], (1, H), jnp.float32, -0.5, 0.5),
        # fc: torch weight is (O, H+F); split + transposed into (H, O) and (F, O)
        "w_fc_h": u(keys[10], (H, O)),
        "w_fc_z": u(keys[11], (F, O)),
        "b_fc": u(keys[12], (1, O)),
    }


if __name__ == "__main__":
    key = jax.random.PRNGKey(0)
    k_param, k_x, k_z = jax.random.split(key, 3)

    params = init_params(k_param)
    x = jax.random.normal(k_x, (B, T, I), jnp.float32)
    zerofeatures = jax.random.normal(k_z, (B, F), jnp.float32)
    lengths = jnp.array([8, 5, 3, 6], dtype=jnp.int32)  # variable lengths, max == T

    out = zero_gru_classifier(x, zerofeatures, lengths, params)
    out = jax.block_until_ready(out)

    ref = reference(x, zerofeatures, lengths, params)
    assert out.shape == (B, O)
    assert jnp.allclose(out, ref, rtol=1e-3, atol=1e-3), (out, ref)

    # TODO(synk): self.layer_norm is declared in __init__ but never used in forward(); omitted.
    print("KERNEL_OK")
</pallas_src>

<mosaic_0001>
module attributes {stable_mosaic.version = 11 : i64} {
  func.func @zerogru_kernel(%arg0: memref<4x8x8xf32, #tpu.memory_space<vmem>>, %arg1: memref<40x128xf32, #tpu.memory_space<vmem>>, %arg2: memref<64x128xf32, #tpu.memory_space<vmem>>, %arg3: memref<64x128xf32, #tpu.memory_space<vmem>>, %arg4: memref<4x4xf32, #tpu.memory_space<vmem>>) attributes {dimension_semantics = [], scalar_prefetch = 0 : i64, scratch_operands = 0 : i64, tpu.core_type = #tpu.core_type<tc>} {
    %c8 = arith.constant 8 : index
    %c0 = arith.constant 0 : index
    %0 = vector.load %arg3[%c8, %c0] : memref<64x128xf32, #tpu.memory_space<vmem>>, vector<4x1xf32>
    %cst = arith.constant 0.000000e+00 : f32
    %1 = vector.broadcast %cst : f32 to vector<4x32xf32>
    %cst_0 = arith.constant 0.000000e+00 : f32
    %2 = vector.broadcast %cst_0 : f32 to vector<4x32xf32>
    %cst_1 = arith.constant 0.000000e+00 : f32
    %3 = vector.broadcast %cst_1 : f32 to vector<4x1xf32>
    %4 = arith.cmpf ogt, %0, %3 : vector<4x1xf32>
    %c0_2 = arith.constant 0 : index
    %c0_3 = arith.constant 0 : index
    %c0_4 = arith.constant 0 : index
    %5 = vector.load %arg0[%c0_2, %c0_3, %c0_4] : memref<4x8x8xf32, #tpu.memory_space<vmem>>, vector<4x1x8xf32>
    %6 = vector.shape_cast %5 : vector<4x1x8xf32> to vector<4x8xf32>
    %7 = tpu.concatenate %1, %6 in 1 : vector<4x32xf32>, vector<4x8xf32> -> vector<4x40xf32>
    %c0_5 = arith.constant 0 : index
    %c0_6 = arith.constant 0 : index
    %8 = vector.load %arg1[%c0_5, %c0_6] : memref<40x128xf32, #tpu.memory_space<vmem>>, vector<40x128xf32>
    %cst_7 = arith.constant dense<0.000000e+00> : vector<4x128xf32>
    %9 = tpu.matmul %7, %8, %cst_7 {dimension_numbers = #tpu.dot_dimension_numbers<[1], [0], [0], [1], [0, 0, 1, 1], [], []>} : vector<4x40xf32>, vector<40x128xf32>, vector<4x128xf32> -> vector<4x128xf32>
    %c0_8 = arith.constant 0 : index
    %c0_9 = arith.constant 0 : index
    %10 = vector.load %arg3[%c0_8, %c0_9] : memref<64x128xf32, #tpu.memory_space<vmem>>, vector<1x128xf32>
    %11 = vector.broadcast %10 : vector<1x128xf32> to vector<4x128xf32>
    %12 = arith.addf %9, %11 : vector<4x128xf32>
    %13 = vector.extract_strided_slice %12 {offsets = [0, 0], sizes = [4, 32], strides = [1, 1]} : vector<4x128xf32> to vector<4x32xf32>
    %14 = arith.negf %13 : vector<4x32xf32>
    %15 = math.exp %14 : vector<4x32xf32>
    %cst_10 = arith.constant 1.000000e+00 : f32
    %16 = vector.broadcast %cst_10 : f32 to vector<4x32xf32>
    %17 = arith.addf %16, %15 : vector<4x32xf32>
    %18 = arith.divf %16, %17 : vector<4x32xf32>
    %19 = vector.extract_strided_slice %12 {offsets = [0, 32], sizes = [4, 32], strides = [1, 1]} : vector<4x128xf32> to vector<4x32xf32>
    %20 = arith.negf %19 : vector<4x32xf32>
    %21 = math.exp %20 : vector<4x32xf32>
    %cst_11 = arith.constant 1.000000e+00 : f32
    %22 = vector.broadcast %cst_11 : f32 to vector<4x32xf32>
    %23 = arith.addf %22, %21 : vector<4x32xf32>
    %24 = arith.divf %22, %23 : vector<4x32xf32>
    %25 = vector.extract_strided_slice %12 {offsets = [0, 64], sizes = [4, 32], strides = [1, 1]} : vector<4x128xf32> to vector<4x32xf32>
    %26 = vector.extract_strided_slice %12 {offsets = [0, 96], sizes = [4, 32], strides = [1, 1]} : vector<4x128xf32> to vector<4x32xf32>
    %27 = arith.mulf %18, %26 : vector<4x32xf32>
    %28 = arith.addf %25, %27 : vector<4x32xf32>
    %29 = math.tanh %28 : vector<4x32xf32>
    %cst_12 = arith.constant 1.000000e+00 : f32
    %30 = vector.broadcast %cst_12 : f32 to vector<4x32xf32>
    %31 = arith.subf %30, %24 : vector<4x32xf32>
    %32 = arith.mulf %31, %29 : vector<4x32xf32>
    %33 = arith.mulf %24, %1 : vector<4x32xf32>
    %34 = arith.addf %32, %33 : vector<4x32xf32>
    %35 = vector.shape_cast %4 : vector<4x1xi1> to vector<4x1xi1>
    %36 = vector.broadcast %35 : vector<4x1xi1> to vector<4x32xi1>
    %37 = arith.select %36, %34, %1 : vector<4x32xi1>, vector<4x32xf32>
    %38 = tpu.concatenate %2, %37 in 1 : vector<4x32xf32>, vector<4x32xf32> -> vector<4x64xf32>
    %c0_13 = arith.constant 0 : index
    %c0_14 = arith.constant 0 : index
    %39 = vector.load %arg2[%c0_13, %c0_14] : memref<64x128xf32, #tpu.memory_space<vmem>>, vector<64x128xf32>
    %cst_15 = arith.constant dense<0.000000e+00> : vector<4x128xf32>
    %40 = tpu.matmul %38, %39, %cst_15 {dimension_numbers = #tpu.dot_dimension_numbers<[1], [0], [0], [1], [0, 0, 1, 1], [], []>} : vector<4x64xf32>, vector<64x128xf32>, vector<4x128xf32> -> vector<4x128xf32>
    %c1 = arith.constant 1 : index
    %c0_16 = arith.constant 0 : index
    %41 = vector.load %arg3[%c1, %c0_16] : memref<64x128xf32, #tpu.memory_space<vmem>>, vector<1x128xf32>
    %42 = vector.broadcast %41 : vector<1x128xf32> to vector<4x128xf32>
    %43 = arith.addf %40, %42 : vector<4x128xf32>
    %44 = vector.extract_strided_slice %43 {offsets = [0, 0], sizes = [4, 32], strides = [1, 1]} : vector<4x128xf32> to vector<4x32xf32>
    %45 = arith.negf %44 : vector<4x32xf32>
    %46 = math.exp %45 : vector<4x32xf32>
    %cst_17 = arith.constant 1.000000e+00 : f32
    %47 = vector.broadcast %cst_17 : f32 to vector<4x32xf32>
    %48 = arith.addf %47, %46 : vector<4x32xf32>
    %49 = arith.divf %47, %48 : vector<4x32xf32>
    %50 = vector.extract_strided_slice %43 {offsets = [0, 32], sizes = [4, 32], strides = [1, 1]} : vector<4x128xf32> to vector<4x32xf32>
    %51 = arith.negf %50 : vector<4x32xf32>
    %52 = math.exp %51 : vector<4x32xf32>
    %cst_18 = arith.constant 1.000000e+00 : f32
    %53 = vector.broadcast %cst_18 : f32 to vector<4x32xf32>
    %54 = arith.addf %53, %52 : vector<4x32xf32>
    %55 = arith.divf %53, %54 : vector<4x32xf32>
    %56 = vector.extract_strided_slice %43 {offsets = [0, 64], sizes = [4, 32], strides = [1, 1]} : vector<4x128xf32> to vector<4x32xf32>
    %57 = vector.extract_strided_slice %43 {offsets = [0, 96], sizes = [4, 32], strides = [1, 1]} : vector<4x128xf32> to vector<4x32xf32>
    %58 = arith.mulf %49, %57 : vector<4x32xf32>
    %59 = arith.addf %56, %58 : vector<4x32xf32>
    %60 = math.tanh %59 : vector<4x32xf32>
    %cst_19 = arith.constant 1.000000e+00 : f32
    %61 = vector.broadcast %cst_19 : f32 to vector<4x32xf32>
    %62 = arith.subf %61, %55 : vector<4x32xf32>
    %63 = arith.mulf %62, %60 : vector<4x32xf32>
    %64 = arith.mulf %55, %2 : vector<4x32xf32>
    %65 = arith.addf %63, %64 : vector<4x32xf32>
    %66 = vector.shape_cast %4 : vector<4x1xi1> to vector<4x1xi1>
    %67 = vector.broadcast %66 : vector<4x1xi1> to vector<4x32xi1>
    %68 = arith.select %67, %65, %2 : vector<4x32xi1>, vector<4x32xf32>
    %cst_20 = arith.constant 1.000000e+00 : f32
    %69 = vector.broadcast %cst_20 : f32 to vector<4x1xf32>
    %70 = arith.cmpf ogt, %0, %69 : vector<4x1xf32>
    %c0_21 = arith.constant 0 : index
    %c1_22 = arith.constant 1 : index
    %c0_23 = arith.constant 0 : index
    %71 = vector.load %arg0[%c0_21, %c1_22, %c0_23] : memref<4x8x8xf32, #tpu.memory_space<vmem>>, vector<4x1x8xf32>
    %72 = vector.shape_cast %71 : vector<4x1x8xf32> to vector<4x8xf32>
    %73 = tpu.concatenate %37, %72 in 1 : vector<4x32xf32>, vector<4x8xf32> -> vector<4x40xf32>
    %c0_24 = arith.constant 0 : index
    %c0_25 = arith.constant 0 : index
    %74 = vector.load %arg1[%c0_24, %c0_25] : memref<40x128xf32, #tpu.memory_space<vmem>>, vector<40x128xf32>
    %cst_26 = arith.constant dense<0.000000e+00> : vector<4x128xf32>
    %75 = tpu.matmul %73, %74, %cst_26 {dimension_numbers = #tpu.dot_dimension_numbers<[1], [0], [0], [1], [0, 0, 1, 1], [], []>} : vector<4x40xf32>, vector<40x128xf32>, vector<4x128xf32> -> vector<4x128xf32>
    %c0_27 = arith.constant 0 : index
    %c0_28 = arith.constant 0 : index
    %76 = vector.load %arg3[%c0_27, %c0_28] : memref<64x128xf32, #tpu.memory_space<vmem>>, vector<1x128xf32>
    %77 = vector.broadcast %76 : vector<1x128xf32> to vector<4x128xf32>
    %78 = arith.addf %75, %77 : vector<4x128xf32>
    %79 = vector.extract_strided_slice %78 {offsets = [0, 0], sizes = [4, 32], strides = [1, 1]} : vector<4x128xf32> to vector<4x32xf32>
    %80 = arith.negf %79 : vector<4x32xf32>
    %81 = math.exp %80 : vector<4x32xf32>
    %cst_29 = arith.constant 1.000000e+00 : f32
    %82 = vector.broadcast %cst_29 : f32 to vector<4x32xf32>
    %83 = arith.addf %82, %81 : vector<4x32xf32>
    %84 = arith.divf %82, %83 : vector<4x32xf32>
    %85 = vector.extract_strided_slice %78 {offsets = [0, 32], sizes = [4, 32], strides = [1, 1]} : vector<4x128xf32> to vector<4x32xf32>
    %86 = arith.negf %85 : vector<4x32xf32>
    %87 = math.exp %86 : vector<4x32xf32>
    %cst_30 = arith.constant 1.000000e+00 : f32
    %88 = vector.broadcast %cst_30 : f32 to vector<4x32xf32>
    %89 = arith.addf %88, %87 : vector<4x32xf32>
    %90 = arith.divf %88, %89 : vector<4x32xf32>
    %91 = vector.extract_strided_slice %78 {offsets = [0, 64], sizes = [4, 32], strides = [1, 1]} : vector<4x128xf32> to vector<4x32xf32>
    %92 = vector.extract_strided_slice %78 {offsets = [0, 96], sizes = [4, 32], strides = [1, 1]} : vector<4x128xf32> to vector<4x32xf32>
    %93 = arith.mulf %84, %92 : vector<4x32xf32>
    %94 = arith.addf %91, %93 : vector<4x32xf32>
    %95 = math.tanh %94 : vector<4x32xf32>
    %cst_31 = arith.constant 1.000000e+00 : f32
    %96 = vector.broadcast %cst_31 : f32 to vector<4x32xf32>
    %97 = arith.subf %96, %90 : vector<4x32xf32>
    %98 = arith.mulf %97, %95 : vector<4x32xf32>
    %99 = arith.mulf %90, %37 : vector<4x32xf32>
    %100 = arith.addf %98, %99 : vector<4x32xf32>
    %101 = vector.shape_cast %70 : vector<4x1xi1> to vector<4x1xi1>
    %102 = vector.broadcast %101 : vector<4x1xi1> to vector<4x32xi1>
    %103 = arith.select %102, %100, %37 : vector<4x32xi1>, vector<4x32xf32>
    %104 = tpu.concatenate %68, %103 in 1 : vector<4x32xf32>, vector<4x32xf32> -> vector<4x64xf32>
    %c0_32 = arith.constant 0 : index
    %c0_33 = arith.constant 0 : index
    %105 = vector.load %arg2[%c0_32, %c0_33] : memref<64x128xf32, #tpu.memory_space<vmem>>, vector<64x128xf32>
    %cst_34 = arith.constant dense<0.000000e+00> : vector<4x128xf32>
    %106 = tpu.matmul %104, %105, %cst_34 {dimension_numbers = #tpu.dot_dimension_numbers<[1], [0], [0], [1], [0, 0, 1, 1], [], []>} : vector<4x64xf32>, vector<64x128xf32>, vector<4x128xf32> -> vector<4x128xf32>
    %c1_35 = arith.constant 1 : index
    %c0_36 = arith.constant 0 : index
    %107 = vector.load %arg3[%c1_35, %c0_36] : memref<64x128xf32, #tpu.memory_space<vmem>>, vector<1x128xf32>
    %108 = vector.broadcast %107 : vector<1x128xf32> to vector<4x128xf32>
    %109 = arith.addf %106, %108 : vector<4x128xf32>
    %110 = vector.extract_strided_slice %109 {offsets = [0, 0], sizes = [4, 32], strides = [1, 1]} : vector<4x128xf32> to vector<4x32xf32>
    %111 = arith.negf %110 : vector<4x32xf32>
    %112 = math.exp %111 : vector<4x32xf32>
    %cst_37 = arith.constant 1.000000e+00 : f32
    %113 = vector.broadcast %cst_37 : f32 to vector<4x32xf32>
    %114 = arith.addf %113, %112 : vector<4x32xf32>
    %115 = arith.divf %113, %114 : vector<4x32xf32>
    %116 = vector.extract_strided_slice %109 {offsets = [0, 32], sizes = [4, 32], strides = [1, 1]} : vector<4x128xf32> to vector<4x32xf32>
    %117 = arith.negf %116 : vector<4x32xf32>
    %118 = math.exp %117 : vector<4x32xf32>
    %cst_38 = arith.constant 1.000000e+00 : f32
    %119 = vector.broadcast %cst_38 : f32 to vector<4x32xf32>
    %120 = arith.addf %119, %118 : vector<4x32xf32>
    %121 = arith.divf %119, %120 : vector<4x32xf32>
    %122 = vector.extract_strided_slice %109 {offsets = [0, 64], sizes = [4, 32], strides = [1, 1]} : vector<4x128xf32> to vector<4x32xf32>
    %123 = vector.extract_strided_slice %109 {offsets = [0, 96], sizes = [4, 32], strides = [1, 1]} : vector<4x128xf32> to vector<4x32xf32>
    %124 = arith.mulf %115, %123 : vector<4x32xf32>
    %125 = arith.addf %122, %124 : vector<4x32xf32>
    %126 = math.tanh %125 : vector<4x32xf32>
    %cst_39 = arith.constant 1.000000e+00 : f32
    %127 = vector.broadcast %cst_39 : f32 to vector<4x32xf32>
    %128 = arith.subf %127, %121 : vector<4x32xf32>
    %129 = arith.mulf %128, %126 : vector<4x32xf32>
    %130 = arith.mulf %121, %68 : vector<4x32xf32>
    %131 = arith.addf %129, %130 : vector<4x32xf32>
    %132 = vector.shape_cast %70 : vector<4x1xi1> to vector<4x1xi1>
    %133 = vector.broadcast %132 : vector<4x1xi1> to vector<4x32xi1>
    %134 = arith.select %133, %131, %68 : vector<4x32xi1>, vector<4x32xf32>
    %cst_40 = arith.constant 2.000000e+00 : f32
    %135 = vector.broadcast %cst_40 : f32 to vector<4x1xf32>
    %136 = arith.cmpf ogt, %0, %135 : vector<4x1xf32>
    %c0_41 = arith.constant 0 : index
    %c2 = arith.constant 2 : index
    %c0_42 = arith.constant 0 : index
    %137 = vector.load %arg0[%c0_41, %c2, %c0_42] : memref<4x8x8xf32, #tpu.memory_space<vmem>>, vector<4x1x8xf32>
    %138 = vector.shape_cast %137 : vector<4x1x8xf32> to vector<4x8xf32>
    %139 = tpu.concatenate %103, %138 in 1 : vector<4x32xf32>, vector<4x8xf32> -> vector<4x40xf32>
    %c0_43 = arith.constant 0 : index
    %c0_44 = arith.constant 0 : index
    %140 = vector.load %arg1[%c0_43, %c0_44] : memref<40x128xf32, #tpu.memory_space<vmem>>, vector<40x128xf32>
    %cst_45 = arith.constant dense<0.000000e+00> : vector<4x128xf32>
    %141 = tpu.matmul %139, %140, %cst_45 {dimension_numbers = #tpu.dot_dimension_numbers<[1], [0], [0], [1], [0, 0, 1, 1], [], []>} : vector<4x40xf32>, vector<40x128xf32>, vector<4x128xf32> -> vector<4x128xf32>
    %c0_46 = arith.constant 0 : index
    %c0_47 = arith.constant 0 : index
    %142 = vector.load %arg3[%c0_46, %c0_47] : memref<64x128xf32, #tpu.memory_space<vmem>>, vector<1x128xf32>
    %143 = vector.broadcast %142 : vector<1x128xf32> to vector<4x128xf32>
    %144 = arith.addf %141, %143 : vector<4x128xf32>
    %145 = vector.extract_strided_slice %144 {offsets = [0, 0], sizes = [4, 32], strides = [1, 1]} : vector<4x128xf32> to vector<4x32xf32>
    %146 = arith.negf %145 : vector<4x32xf32>
    %147 = math.exp %146 : vector<4x32xf32>
    %cst_48 = arith.constant 1.000000e+00 : f32
    %148 = vector.broadcast %cst_48 : f32 to vector<4x32xf32>
    %149 = arith.addf %148, %147 : vector<4x32xf32>
    %150 = arith.divf %148, %149 : vector<4x32xf32>
    %151 = vector.extract_strided_slice %144 {offsets = [0, 32], sizes = [4, 32], strides = [1, 1]} : vector<4x128xf32> to vector<4x32xf32>
    %152 = arith.negf %151 : vector<4x32xf32>
    %153 = math.exp %152 : vector<4x32xf32>
    %cst_49 = arith.constant 1.000000e+00 : f32
    %154 = vector.broadcast %cst_49 : f32 to vector<4x32xf32>
    %155 = arith.addf %154, %153 : vector<4x32xf32>
    %156 = arith.divf %154, %155 : vector<4x32xf32>
    %157 = vector.extract_strided_slice %144 {offsets = [0, 64], sizes = [4, 32], strides = [1, 1]} : vector<4x128xf32> to vector<4x32xf32>
    %158 = vector.extract_strided_slice %144 {offsets = [0, 96], sizes = [4, 32], strides = [1, 1]} : vector<4x128xf32> to vector<4x32xf32>
    %159 = arith.mulf %150, %158 : vector<4x32xf32>
    %160 = arith.addf %157, %159 : vector<4x32xf32>
    %161 = math.tanh %160 : vector<4x32xf32>
    %cst_50 = arith.constant 1.000000e+00 : f32
    %162 = vector.broadcast %cst_50 : f32 to vector<4x32xf32>
    %163 = arith.subf %162, %156 : vector<4x32xf32>
    %164 = arith.mulf %163, %161 : vector<4x32xf32>
    %165 = arith.mulf %156, %103 : vector<4x32xf32>
    %166 = arith.addf %164, %165 : vector<4x32xf32>
    %167 = vector.shape_cast %136 : vector<4x1xi1> to vector<4x1xi1>
    %168 = vector.broadcast %167 : vector<4x1xi1> to vector<4x32xi1>
    %169 = arith.select %168, %166, %103 : vector<4x32xi1>, vector<4x32xf32>
    %170 = tpu.concatenate %134, %169 in 1 : vector<4x32xf32>, vector<4x32xf32> -> vector<4x64xf32>
    %c0_51 = arith.constant 0 : index
    %c0_52 = arith.constant 0 : index
    %171 = vector.load %arg2[%c0_51, %c0_52] : memref<64x128xf32, #tpu.memory_space<vmem>>, vector<64x128xf32>
    %cst_53 = arith.constant dense<0.000000e+00> : vector<4x128xf32>
    %172 = tpu.matmul %170, %171, %cst_53 {dimension_numbers = #tpu.dot_dimension_numbers<[1], [0], [0], [1], [0, 0, 1, 1], [], []>} : vector<4x64xf32>, vector<64x128xf32>, vector<4x128xf32> -> vector<4x128xf32>
    %c1_54 = arith.constant 1 : index
    %c0_55 = arith.constant 0 : index
    %173 = vector.load %arg3[%c1_54, %c0_55] : memref<64x128xf32, #tpu.memory_space<vmem>>, vector<1x128xf32>
    %174 = vector.broadcast %173 : vector<1x128xf32> to vector<4x128xf32>
    %175 = arith.addf %172, %174 : vector<4x128xf32>
    %176 = vector.extract_strided_slice %175 {offsets = [0, 0], sizes = [4, 32], strides = [1, 1]} : vector<4x128xf32> to vector<4x32xf32>
    %177 = arith.negf %176 : vector<4x32xf32>
    %178 = math.exp %177 : vector<4x32xf32>
    %cst_56 = arith.constant 1.000000e+00 : f32
    %179 = vector.broadcast %cst_56 : f32 to vector<4x32xf32>
    %180 = arith.addf %179, %178 : vector<4x32xf32>
    %181 = arith.divf %179, %180 : vector<4x32xf32>
    %182 = vector.extract_strided_slice %175 {offsets = [0, 32], sizes = [4, 32], strides = [1, 1]} : vector<4x128xf32> to vector<4x32xf32>
    %183 = arith.negf %182 : vector<4x32xf32>
    %184 = math.exp %183 : vector<4x32xf32>
    %cst_57 = arith.constant 1.000000e+00 : f32
    %185 = vector.broadcast %cst_57 : f32 to vector<4x32xf32>
    %186 = arith.addf %185, %184 : vector<4x32xf32>
    %187 = arith.divf %185, %186 : vector<4x32xf32>
    %188 = vector.extract_strided_slice %175 {offsets = [0, 64], sizes = [4, 32], strides = [1, 1]} : vector<4x128xf32> to vector<4x32xf32>
    %189 = vector.extract_strided_slice %175 {offsets = [0, 96], sizes = [4, 32], strides = [1, 1]} : vector<4x128xf32> to vector<4x32xf32>
    %190 = arith.mulf %181, %189 : vector<4x32xf32>
    %191 = arith.addf %188, %190 : vector<4x32xf32>
    %192 = math.tanh %191 : vector<4x32xf32>
    %cst_58 = arith.constant 1.000000e+00 : f32
    %193 = vector.broadcast %cst_58 : f32 to vector<4x32xf32>
    %194 = arith.subf %193, %187 : vector<4x32xf32>
    %195 = arith.mulf %194, %192 : vector<4x32xf32>
    %196 = arith.mulf %187, %134 : vector<4x32xf32>
    %197 = arith.addf %195, %196 : vector<4x32xf32>
    %198 = vector.shape_cast %136 : vector<4x1xi1> to vector<4x1xi1>
    %199 = vector.broadcast %198 : vector<4x1xi1> to vector<4x32xi1>
    %200 = arith.select %199, %197, %134 : vector<4x32xi1>, vector<4x32xf32>
    %cst_59 = arith.constant 3.000000e+00 : f32
    %201 = vector.broadcast %cst_59 : f32 to vector<4x1xf32>
    %202 = arith.cmpf ogt, %0, %201 : vector<4x1xf32>
    %c0_60 = arith.constant 0 : index
    %c3 = arith.constant 3 : index
    %c0_61 = arith.constant 0 : index
    %203 = vector.load %arg0[%c0_60, %c3, %c0_61] : memref<4x8x8xf32, #tpu.memory_space<vmem>>, vector<4x1x8xf32>
    %204 = vector.shape_cast %203 : vector<4x1x8xf32> to vector<4x8xf32>
    %205 = tpu.concatenate %169, %204 in 1 : vector<4x32xf32>, vector<4x8xf32> -> vector<4x40xf32>
    %c0_62 = arith.constant 0 : index
    %c0_63 = arith.constant 0 : index
    %206 = vector.load %arg1[%c0_62, %c0_63] : memref<40x128xf32, #tpu.memory_space<vmem>>, vector<40x128xf32>
    %cst_64 = arith.constant dense<0.000000e+00> : vector<4x128xf32>
    %207 = tpu.matmul %205, %206, %cst_64 {dimension_numbers = #tpu.dot_dimension_numbers<[1], [0], [0], [1], [0, 0, 1, 1], [], []>} : vector<4x40xf32>, vector<40x128xf32>, vector<4x128xf32> -> vector<4x128xf32>
    %c0_65 = arith.constant 0 : index
    %c0_66 = arith.constant 0 : index
    %208 = vector.load %arg3[%c0_65, %c0_66] : memref<64x128xf32, #tpu.memory_space<vmem>>, vector<1x128xf32>
    %209 = vector.broadcast %208 : vector<1x128xf32> to vector<4x128xf32>
    %210 = arith.addf %207, %209 : vector<4x128xf32>
    %211 = vector.extract_strided_slice %210 {offsets = [0, 0], sizes = [4, 32], strides = [1, 1]} : vector<4x128xf32> to vector<4x32xf32>
    %212 = arith.negf %211 : vector<4x32xf32>
    %213 = math.exp %212 : vector<4x32xf32>
    %cst_67 = arith.constant 1.000000e+00 : f32
    %214 = vector.broadcast %cst_67 : f32 to vector<4x32xf32>
    %215 = arith.addf %214, %213 : vector<4x32xf32>
    %216 = arith.divf %214, %215 : vector<4x32xf32>
    %217 = vector.extract_strided_slice %210 {offsets = [0, 32], sizes = [4, 32], strides = [1, 1]} : vector<4x128xf32> to vector<4x32xf32>
    %218 = arith.negf %217 : vector<4x32xf32>
    %219 = math.exp %218 : vector<4x32xf32>
    %cst_68 = arith.constant 1.000000e+00 : f32
    %220 = vector.broadcast %cst_68 : f32 to vector<4x32xf32>
    %221 = arith.addf %220, %219 : vector<4x32xf32>
    %222 = arith.divf %220, %221 : vector<4x32xf32>
    %223 = vector.extract_strided_slice %210 {offsets = [0, 64], sizes = [4, 32], strides = [1, 1]} : vector<4x128xf32> to vector<4x32xf32>
    %224 = vector.extract_strided_slice %210 {offsets = [0, 96], sizes = [4, 32], strides = [1, 1]} : vector<4x128xf32> to vector<4x32xf32>
    %225 = arith.mulf %216, %224 : vector<4x32xf32>
    %226 = arith.addf %223, %225 : vector<4x32xf32>
    %227 = math.tanh %226 : vector<4x32xf32>
    %cst_69 = arith.constant 1.000000e+00 : f32
    %228 = vector.broadcast %cst_69 : f32 to vector<4x32xf32>
    %229 = arith.subf %228, %222 : vector<4x32xf32>
    %230 = arith.mulf %229, %227 : vector<4x32xf32>
    %231 = arith.mulf %222, %169 : vector<4x32xf32>
    %232 = arith.addf %230, %231 : vector<4x32xf32>
    %233 = vector.shape_cast %202 : vector<4x1xi1> to vector<4x1xi1>
    %234 = vector.broadcast %233 : vector<4x1xi1> to vector<4x32xi1>
    %235 = arith.select %234, %232, %169 : vector<4x32xi1>, vector<4x32xf32>
    %236 = tpu.concatenate %200, %235 in 1 : vector<4x32xf32>, vector<4x32xf32> -> vector<4x64xf32>
    %c0_70 = arith.constant 0 : index
    %c0_71 = arith.constant 0 : index
    %237 = vector.load %arg2[%c0_70, %c0_71] : memref<64x128xf32, #tpu.memory_space<vmem>>, vector<64x128xf32>
    %cst_72 = arith.constant dense<0.000000e+00> : vector<4x128xf32>
    %238 = tpu.matmul %236, %237, %cst_72 {dimension_numbers = #tpu.dot_dimension_numbers<[1], [0], [0], [1], [0, 0, 1, 1], [], []>} : vector<4x64xf32>, vector<64x128xf32>, vector<4x128xf32> -> vector<4x128xf32>
    %c1_73 = arith.constant 1 : index
    %c0_74 = arith.constant 0 : index
    %239 = vector.load %arg3[%c1_73, %c0_74] : memref<64x128xf32, #tpu.memory_space<vmem>>, vector<1x128xf32>
    %240 = vector.broadcast %239 : vector<1x128xf32> to vector<4x128xf32>
    %241 = arith.addf %238, %240 : vector<4x128xf32>
    %242 = vector.extract_strided_slice %241 {offsets = [0, 0], sizes = [4, 32], strides = [1, 1]} : vector<4x128xf32> to vector<4x32xf32>
    %243 = arith.negf %242 : vector<4x32xf32>
    %244 = math.exp %243 : vector<4x32xf32>
    %cst_75 = arith.constant 1.000000e+00 : f32
    %245 = vector.broadcast %cst_75 : f32 to vector<4x32xf32>
    %246 = arith.addf %245, %244 : vector<4x32xf32>
    %247 = arith.divf %245, %246 : vector<4x32xf32>
    %248 = vector.extract_strided_slice %241 {offsets = [0, 32], sizes = [4, 32], strides = [1, 1]} : vector<4x128xf32> to vector<4x32xf32>
    %249 = arith.negf %248 : vector<4x32xf32>
    %250 = math.exp %249 : vector<4x32xf32>
    %cst_76 = arith.constant 1.000000e+00 : f32
    %251 = vector.broadcast %cst_76 : f32 to vector<4x32xf32>
    %252 = arith.addf %251, %250 : vector<4x32xf32>
    %253 = arith.divf %251, %252 : vector<4x32xf32>
    %254 = vector.extract_strided_slice %241 {offsets = [0, 64], sizes = [4, 32], strides = [1, 1]} : vector<4x128xf32> to vector<4x32xf32>
    %255 = vector.extract_strided_slice %241 {offsets = [0, 96], sizes = [4, 32], strides = [1, 1]} : vector<4x128xf32> to vector<4x32xf32>
    %256 = arith.mulf %247, %255 : vector<4x32xf32>
    %257 = arith.addf %254, %256 : vector<4x32xf32>
    %258 = math.tanh %257 : vector<4x32xf32>
    %cst_77 = arith.constant 1.000000e+00 : f32
    %259 = vector.broadcast %cst_77 : f32 to vector<4x32xf32>
    %260 = arith.subf %259, %253 : vector<4x32xf32>
    %261 = arith.mulf %260, %258 : vector<4x32xf32>
    %262 = arith.mulf %253, %200 : vector<4x32xf32>
    %263 = arith.addf %261, %262 : vector<4x32xf32>
    %264 = vector.shape_cast %202 : vector<4x1xi1> to vector<4x1xi1>
    %265 = vector.broadcast %264 : vector<4x1xi1> to vector<4x32xi1>
    %266 = arith.select %265, %263, %200 : vector<4x32xi1>, vector<4x32xf32>
    %cst_78 = arith.constant 4.000000e+00 : f32
    %267 = vector.broadcast %cst_78 : f32 to vector<4x1xf32>
    %268 = arith.cmpf ogt, %0, %267 : vector<4x1xf32>
    %c0_79 = arith.constant 0 : index
    %c4 = arith.constant 4 : index
    %c0_80 = arith.constant 0 : index
    %269 = vector.load %arg0[%c0_79, %c4, %c0_80] : memref<4x8x8xf32, #tpu.memory_space<vmem>>, vector<4x1x8xf32>
    %270 = vector.shape_cast %269 : vector<4x1x8xf32> to vector<4x8xf32>
    %271 = tpu.concatenate %235, %270 in 1 : vector<4x32xf32>, vector<4x8xf32> -> vector<4x40xf32>
    %c0_81 = arith.constant 0 : index
    %c0_82 = arith.constant 0 : index
    %272 = vector.load %arg1[%c0_81, %c0_82] : memref<40x128xf32, #tpu.memory_space<vmem>>, vector<40x128xf32>
    %cst_83 = arith.constant dense<0.000000e+00> : vector<4x128xf32>
    %273 = tpu.matmul %271, %272, %cst_83 {dimension_numbers = #tpu.dot_dimension_numbers<[1], [0], [0], [1], [0, 0, 1, 1], [], []>} : vector<4x40xf32>, vector<40x128xf32>, vector<4x128xf32> -> vector<4x128xf32>
    %c0_84 = arith.constant 0 : index
    %c0_85 = arith.constant 0 : index
    %274 = vector.load %arg3[%c0_84, %c0_85] : memref<64x128xf32, #tpu.memory_space<vmem>>, vector<1x128xf32>
    %275 = vector.broadcast %274 : vector<1x128xf32> to vector<4x128xf32>
    %276 = arith.addf %273, %275 : vector<4x128xf32>
    %277 = vector.extract_strided_slice %276 {offsets = [0, 0], sizes = [4, 32], strides = [1, 1]} : vector<4x128xf32> to vector<4x32xf32>
    %278 = arith.negf %277 : vector<4x32xf32>
    %279 = math.exp %278 : vector<4x32xf32>
    %cst_86 = arith.constant 1.000000e+00 : f32
    %280 = vector.broadcast %cst_86 : f32 to vector<4x32xf32>
    %281 = arith.addf %280, %279 : vector<4x32xf32>
    %282 = arith.divf %280, %281 : vector<4x32xf32>
    %283 = vector.extract_strided_slice %276 {offsets = [0, 32], sizes = [4, 32], strides = [1, 1]} : vector<4x128xf32> to vector<4x32xf32>
    %284 = arith.negf %283 : vector<4x32xf32>
    %285 = math.exp %284 : vector<4x32xf32>
    %cst_87 = arith.constant 1.000000e+00 : f32
    %286 = vector.broadcast %cst_87 : f32 to vector<4x32xf32>
    %287 = arith.addf %286, %285 : vector<4x32xf32>
    %288 = arith.divf %286, %287 : vector<4x32xf32>
    %289 = vector.extract_strided_slice %276 {offsets = [0, 64], sizes = [4, 32], strides = [1, 1]} : vector<4x128xf32> to vector<4x32xf32>
    %290 = vector.extract_strided_slice %276 {offsets = [0, 96], sizes = [4, 32], strides = [1, 1]} : vector<4x128xf32> to vector<4x32xf32>
    %291 = arith.mulf %282, %290 : vector<4x32xf32>
    %292 = arith.addf %289, %291 : vector<4x32xf32>
    %293 = math.tanh %292 : vector<4x32xf32>
    %cst_88 = arith.constant 1.000000e+00 : f32
    %294 = vector.broadcast %cst_88 : f32 to vector<4x32xf32>
    %295 = arith.subf %294, %288 : vector<4x32xf32>
    %296 = arith.mulf %295, %293 : vector<4x32xf32>
    %297 = arith.mulf %288, %235 : vector<4x32xf32>
    %298 = arith.addf %296, %297 : vector<4x32xf32>
    %299 = vector.shape_cast %268 : vector<4x1xi1> to vector<4x1xi1>
    %300 = vector.broadcast %299 : vector<4x1xi1> to vector<4x32xi1>
    %301 = arith.select %300, %298, %235 : vector<4x32xi1>, vector<4x32xf32>
    %302 = tpu.concatenate %266, %301 in 1 : vector<4x32xf32>, vector<4x32xf32> -> vector<4x64xf32>
    %c0_89 = arith.constant 0 : index
    %c0_90 = arith.constant 0 : index
    %303 = vector.load %arg2[%c0_89, %c0_90] : memref<64x128xf32, #tpu.memory_space<vmem>>, vector<64x128xf32>
    %cst_91 = arith.constant dense<0.000000e+00> : vector<4x128xf32>
    %304 = tpu.matmul %302, %303, %cst_91 {dimension_numbers = #tpu.dot_dimension_numbers<[1], [0], [0], [1], [0, 0, 1, 1], [], []>} : vector<4x64xf32>, vector<64x128xf32>, vector<4x128xf32> -> vector<4x128xf32>
    %c1_92 = arith.constant 1 : index
    %c0_93 = arith.constant 0 : index
    %305 = vector.load %arg3[%c1_92, %c0_93] : memref<64x128xf32, #tpu.memory_space<vmem>>, vector<1x128xf32>
    %306 = vector.broadcast %305 : vector<1x128xf32> to vector<4x128xf32>
    %307 = arith.addf %304, %306 : vector<4x128xf32>
    %308 = vector.extract_strided_slice %307 {offsets = [0, 0], sizes = [4, 32], strides = [1, 1]} : vector<4x128xf32> to vector<4x32xf32>
    %309 = arith.negf %308 : vector<4x32xf32>
    %310 = math.exp %309 : vector<4x32xf32>
    %cst_94 = arith.constant 1.000000e+00 : f32
    %311 = vector.broadcast %cst_94 : f32 to vector<4x32xf32>
    %312 = arith.addf %311, %310 : vector<4x32xf32>
    %313 = arith.divf %311, %312 : vector<4x32xf32>
    %314 = vector.extract_strided_slice %307 {offsets = [0, 32], sizes = [4, 32], strides = [1, 1]} : vector<4x128xf32> to vector<4x32xf32>
    %315 = arith.negf %314 : vector<4x32xf32>
    %316 = math.exp %315 : vector<4x32xf32>
    %cst_95 = arith.constant 1.000000e+00 : f32
    %317 = vector.broadcast %cst_95 : f32 to vector<4x32xf32>
    %318 = arith.addf %317, %316 : vector<4x32xf32>
    %319 = arith.divf %317, %318 : vector<4x32xf32>
    %320 = vector.extract_strided_slice %307 {offsets = [0, 64], sizes = [4, 32], strides = [1, 1]} : vector<4x128xf32> to vector<4x32xf32>
    %321 = vector.extract_strided_slice %307 {offsets = [0, 96], sizes = [4, 32], strides = [1, 1]} : vector<4x128xf32> to vector<4x32xf32>
    %322 = arith.mulf %313, %321 : vector<4x32xf32>
    %323 = arith.addf %320, %322 : vector<4x32xf32>
    %324 = math.tanh %323 : vector<4x32xf32>
    %cst_96 = arith.constant 1.000000e+00 : f32
    %325 = vector.broadcast %cst_96 : f32 to vector<4x32xf32>
    %326 = arith.subf %325, %319 : vector<4x32xf32>
    %327 = arith.mulf %326, %324 : vector<4x32xf32>
    %328 = arith.mulf %319, %266 : vector<4x32xf32>
    %329 = arith.addf %327, %328 : vector<4x32xf32>
    %330 = vector.shape_cast %268 : vector<4x1xi1> to vector<4x1xi1>
    %331 = vector.broadcast %330 : vector<4x1xi1> to vector<4x32xi1>
    %332 = arith.select %331, %329, %266 : vector<4x32xi1>, vector<4x32xf32>
    %cst_97 = arith.constant 5.000000e+00 : f32
    %333 = vector.broadcast %cst_97 : f32 to vector<4x1xf32>
    %334 = arith.cmpf ogt, %0, %333 : vector<4x1xf32>
    %c0_98 = arith.constant 0 : index
    %c5 = arith.constant 5 : index
    %c0_99 = arith.constant 0 : index
    %335 = vector.load %arg0[%c0_98, %c5, %c0_99] : memref<4x8x8xf32, #tpu.memory_space<vmem>>, vector<4x1x8xf32>
    %336 = vector.shape_cast %335 : vector<4x1x8xf32> to vector<4x8xf32>
    %337 = tpu.concatenate %301, %336 in 1 : vector<4x32xf32>, vector<4x8xf32> -> vector<4x40xf32>
    %c0_100 = arith.constant 0 : index
    %c0_101 = arith.constant 0 : index
    %338 = vector.load %arg1[%c0_100, %c0_101] : memref<40x128xf32, #tpu.memory_space<vmem>>, vector<40x128xf32>
    %cst_102 = arith.constant dense<0.000000e+00> : vector<4x128xf32>
    %339 = tpu.matmul %337, %338, %cst_102 {dimension_numbers = #tpu.dot_dimension_numbers<[1], [0], [0], [1], [0, 0, 1, 1], [], []>} : vector<4x40xf32>, vector<40x128xf32>, vector<4x128xf32> -> vector<4x128xf32>
    %c0_103 = arith.constant 0 : index
    %c0_104 = arith.constant 0 : index
    %340 = vector.load %arg3[%c0_103, %c0_104] : memref<64x128xf32, #tpu.memory_space<vmem>>, vector<1x128xf32>
    %341 = vector.broadcast %340 : vector<1x128xf32> to vector<4x128xf32>
    %342 = arith.addf %339, %341 : vector<4x128xf32>
    %343 = vector.extract_strided_slice %342 {offsets = [0, 0], sizes = [4, 32], strides = [1, 1]} : vector<4x128xf32> to vector<4x32xf32>
    %344 = arith.negf %343 : vector<4x32xf32>
    %345 = math.exp %344 : vector<4x32xf32>
    %cst_105 = arith.constant 1.000000e+00 : f32
    %346 = vector.broadcast %cst_105 : f32 to vector<4x32xf32>
    %347 = arith.addf %346, %345 : vector<4x32xf32>
    %348 = arith.divf %346, %347 : vector<4x32xf32>
    %349 = vector.extract_strided_slice %342 {offsets = [0, 32], sizes = [4, 32], strides = [1, 1]} : vector<4x128xf32> to vector<4x32xf32>
    %350 = arith.negf %349 : vector<4x32xf32>
    %351 = math.exp %350 : vector<4x32xf32>
    %cst_106 = arith.constant 1.000000e+00 : f32
    %352 = vector.broadcast %cst_106 : f32 to vector<4x32xf32>
    %353 = arith.addf %352, %351 : vector<4x32xf32>
    %354 = arith.divf %352, %353 : vector<4x32xf32>
    %355 = vector.extract_strided_slice %342 {offsets = [0, 64], sizes = [4, 32], strides = [1, 1]} : vector<4x128xf32> to vector<4x32xf32>
    %356 = vector.extract_strided_slice %342 {offsets = [0, 96], sizes = [4, 32], strides = [1, 1]} : vector<4x128xf32> to vector<4x32xf32>
    %357 = arith.mulf %348, %356 : vector<4x32xf32>
    %358 = arith.addf %355, %357 : vector<4x32xf32>
    %359 = math.tanh %358 : vector<4x32xf32>
    %cst_107 = arith.constant 1.000000e+00 : f32
    %360 = vector.broadcast %cst_107 : f32 to vector<4x32xf32>
    %361 = arith.subf %360, %354 : vector<4x32xf32>
    %362 = arith.mulf %361, %359 : vector<4x32xf32>
    %363 = arith.mulf %354, %301 : vector<4x32xf32>
    %364 = arith.addf %362, %363 : vector<4x32xf32>
    %365 = vector.shape_cast %334 : vector<4x1xi1> to vector<4x1xi1>
    %366 = vector.broadcast %365 : vector<4x1xi1> to vector<4x32xi1>
    %367 = arith.select %366, %364, %301 : vector<4x32xi1>, vector<4x32xf32>
    %368 = tpu.concatenate %332, %367 in 1 : vector<4x32xf32>, vector<4x32xf32> -> vector<4x64xf32>
    %c0_108 = arith.constant 0 : index
    %c0_109 = arith.constant 0 : index
    %369 = vector.load %arg2[%c0_108, %c0_109] : memref<64x128xf32, #tpu.memory_space<vmem>>, vector<64x128xf32>
    %cst_110 = arith.constant dense<0.000000e+00> : vector<4x128xf32>
    %370 = tpu.matmul %368, %369, %cst_110 {dimension_numbers = #tpu.dot_dimension_numbers<[1], [0], [0], [1], [0, 0, 1, 1], [], []>} : vector<4x64xf32>, vector<64x128xf32>, vector<4x128xf32> -> vector<4x128xf32>
    %c1_111 = arith.constant 1 : index
    %c0_112 = arith.constant 0 : index
    %371 = vector.load %arg3[%c1_111, %c0_112] : memref<64x128xf32, #tpu.memory_space<vmem>>, vector<1x128xf32>
    %372 = vector.broadcast %371 : vector<1x128xf32> to vector<4x128xf32>
    %373 = arith.addf %370, %372 : vector<4x128xf32>
    %374 = vector.extract_strided_slice %373 {offsets = [0, 0], sizes = [4, 32], strides = [1, 1]} : vector<4x128xf32> to vector<4x32xf32>
    %375 = arith.negf %374 : vector<4x32xf32>
    %376 = math.exp %375 : vector<4x32xf32>
    %cst_113 = arith.constant 1.000000e+00 : f32
    %377 = vector.broadcast %cst_113 : f32 to vector<4x32xf32>
    %378 = arith.addf %377, %376 : vector<4x32xf32>
    %379 = arith.divf %377, %378 : vector<4x32xf32>
    %380 = vector.extract_strided_slice %373 {offsets = [0, 32], sizes = [4, 32], strides = [1, 1]} : vector<4x128xf32> to vector<4x32xf32>
    %381 = arith.negf %380 : vector<4x32xf32>
    %382 = math.exp %381 : vector<4x32xf32>
    %cst_114 = arith.constant 1.000000e+00 : f32
    %383 = vector.broadcast %cst_114 : f32 to vector<4x32xf32>
    %384 = arith.addf %383, %382 : vector<4x32xf32>
    %385 = arith.divf %383, %384 : vector<4x32xf32>
    %386 = vector.extract_strided_slice %373 {offsets = [0, 64], sizes = [4, 32], strides = [1, 1]} : vector<4x128xf32> to vector<4x32xf32>
    %387 = vector.extract_strided_slice %373 {offsets = [0, 96], sizes = [4, 32], strides = [1, 1]} : vector<4x128xf32> to vector<4x32xf32>
    %388 = arith.mulf %379, %387 : vector<4x32xf32>
    %389 = arith.addf %386, %388 : vector<4x32xf32>
    %390 = math.tanh %389 : vector<4x32xf32>
    %cst_115 = arith.constant 1.000000e+00 : f32
    %391 = vector.broadcast %cst_115 : f32 to vector<4x32xf32>
    %392 = arith.subf %391, %385 : vector<4x32xf32>
    %393 = arith.mulf %392, %390 : vector<4x32xf32>
    %394 = arith.mulf %385, %332 : vector<4x32xf32>
    %395 = arith.addf %393, %394 : vector<4x32xf32>
    %396 = vector.shape_cast %334 : vector<4x1xi1> to vector<4x1xi1>
    %397 = vector.broadcast %396 : vector<4x1xi1> to vector<4x32xi1>
    %398 = arith.select %397, %395, %332 : vector<4x32xi1>, vector<4x32xf32>
    %cst_116 = arith.constant 6.000000e+00 : f32
    %399 = vector.broadcast %cst_116 : f32 to vector<4x1xf32>
    %400 = arith.cmpf ogt, %0, %399 : vector<4x1xf32>
    %c0_117 = arith.constant 0 : index
    %c6 = arith.constant 6 : index
    %c0_118 = arith.constant 0 : index
    %401 = vector.load %arg0[%c0_117, %c6, %c0_118] : memref<4x8x8xf32, #tpu.memory_space<vmem>>, vector<4x1x8xf32>
    %402 = vector.shape_cast %401 : vector<4x1x8xf32> to vector<4x8xf32>
    %403 = tpu.concatenate %367, %402 in 1 : vector<4x32xf32>, vector<4x8xf32> -> vector<4x40xf32>
    %c0_119 = arith.constant 0 : index
    %c0_120 = arith.constant 0 : index
    %404 = vector.load %arg1[%c0_119, %c0_120] : memref<40x128xf32, #tpu.memory_space<vmem>>, vector<40x128xf32>
    %cst_121 = arith.constant dense<0.000000e+00> : vector<4x128xf32>
    %405 = tpu.matmul %403, %404, %cst_121 {dimension_numbers = #tpu.dot_dimension_numbers<[1], [0], [0], [1], [0, 0, 1, 1], [], []>} : vector<4x40xf32>, vector<40x128xf32>, vector<4x128xf32> -> vector<4x128xf32>
    %c0_122 = arith.constant 0 : index
    %c0_123 = arith.constant 0 : index
    %406 = vector.load %arg3[%c0_122, %c0_123] : memref<64x128xf32, #tpu.memory_space<vmem>>, vector<1x128xf32>
    %407 = vector.broadcast %406 : vector<1x128xf32> to vector<4x128xf32>
    %408 = arith.addf %405, %407 : vector<4x128xf32>
    %409 = vector.extract_strided_slice %408 {offsets = [0, 0], sizes = [4, 32], strides = [1, 1]} : vector<4x128xf32> to vector<4x32xf32>
    %410 = arith.negf %409 : vector<4x32xf32>
    %411 = math.exp %410 : vector<4x32xf32>
    %cst_124 = arith.constant 1.000000e+00 : f32
    %412 = vector.broadcast %cst_124 : f32 to vector<4x32xf32>
    %413 = arith.addf %412, %411 : vector<4x32xf32>
    %414 = arith.divf %412, %413 : vector<4x32xf32>
    %415 = vector.extract_strided_slice %408 {offsets = [0, 32], sizes = [4, 32], strides = [1, 1]} : vector<4x128xf32> to vector<4x32xf32>
    %416 = arith.negf %415 : vector<4x32xf32>
    %417 = math.exp %416 : vector<4x32xf32>
    %cst_125 = arith.constant 1.000000e+00 : f32
    %418 = vector.broadcast %cst_125 : f32 to vector<4x32xf32>
    %419 = arith.addf %418, %417 : vector<4x32xf32>
    %420 = arith.divf %418, %419 : vector<4x32xf32>
    %421 = vector.extract_strided_slice %408 {offsets = [0, 64], sizes = [4, 32], strides = [1, 1]} : vector<4x128xf32> to vector<4x32xf32>
    %422 = vector.extract_strided_slice %408 {offsets = [0, 96], sizes = [4, 32], strides = [1, 1]} : vector<4x128xf32> to vector<4x32xf32>
    %423 = arith.mulf %414, %422 : vector<4x32xf32>
    %424 = arith.addf %421, %423 : vector<4x32xf32>
    %425 = math.tanh %424 : vector<4x32xf32>
    %cst_126 = arith.constant 1.000000e+00 : f32
    %426 = vector.broadcast %cst_126 : f32 to vector<4x32xf32>
    %427 = arith.subf %426, %420 : vector<4x32xf32>
    %428 = arith.mulf %427, %425 : vector<4x32xf32>
    %429 = arith.mulf %420, %367 : vector<4x32xf32>
    %430 = arith.addf %428, %429 : vector<4x32xf32>
    %431 = vector.shape_cast %400 : vector<4x1xi1> to vector<4x1xi1>
    %432 = vector.broadcast %431 : vector<4x1xi1> to vector<4x32xi1>
    %433 = arith.select %432, %430, %367 : vector<4x32xi1>, vector<4x32xf32>
    %434 = tpu.concatenate %398, %433 in 1 : vector<4x32xf32>, vector<4x32xf32> -> vector<4x64xf32>
    %c0_127 = arith.constant 0 : index
    %c0_128 = arith.constant 0 : index
    %435 = vector.load %arg2[%c0_127, %c0_128] : memref<64x128xf32, #tpu.memory_space<vmem>>, vector<64x128xf32>
    %cst_129 = arith.constant dense<0.000000e+00> : vector<4x128xf32>
    %436 = tpu.matmul %434, %435, %cst_129 {dimension_numbers = #tpu.dot_dimension_numbers<[1], [0], [0], [1], [0, 0, 1, 1], [], []>} : vector<4x64xf32>, vector<64x128xf32>, vector<4x128xf32> -> vector<4x128xf32>
    %c1_130 = arith.constant 1 : index
    %c0_131 = arith.constant 0 : index
    %437 = vector.load %arg3[%c1_130, %c0_131] : memref<64x128xf32, #tpu.memory_space<vmem>>, vector<1x128xf32>
    %438 = vector.broadcast %437 : vector<1x128xf32> to vector<4x128xf32>
    %439 = arith.addf %436, %438 : vector<4x128xf32>
    %440 = vector.extract_strided_slice %439 {offsets = [0, 0], sizes = [4, 32], strides = [1, 1]} : vector<4x128xf32> to vector<4x32xf32>
    %441 = arith.negf %440 : vector<4x32xf32>
    %442 = math.exp %441 : vector<4x32xf32>
    %cst_132 = arith.constant 1.000000e+00 : f32
    %443 = vector.broadcast %cst_132 : f32 to vector<4x32xf32>
    %444 = arith.addf %443, %442 : vector<4x32xf32>
    %445 = arith.divf %443, %444 : vector<4x32xf32>
    %446 = vector.extract_strided_slice %439 {offsets = [0, 32], sizes = [4, 32], strides = [1, 1]} : vector<4x128xf32> to vector<4x32xf32>
    %447 = arith.negf %446 : vector<4x32xf32>
    %448 = math.exp %447 : vector<4x32xf32>
    %cst_133 = arith.constant 1.000000e+00 : f32
    %449 = vector.broadcast %cst_133 : f32 to vector<4x32xf32>
    %450 = arith.addf %449, %448 : vector<4x32xf32>
    %451 = arith.divf %449, %450 : vector<4x32xf32>
    %452 = vector.extract_strided_slice %439 {offsets = [0, 64], sizes = [4, 32], strides = [1, 1]} : vector<4x128xf32> to vector<4x32xf32>
    %453 = vector.extract_strided_slice %439 {offsets = [0, 96], sizes = [4, 32], strides = [1, 1]} : vector<4x128xf32> to vector<4x32xf32>
    %454 = arith.mulf %445, %453 : vector<4x32xf32>
    %455 = arith.addf %452, %454 : vector<4x32xf32>
    %456 = math.tanh %455 : vector<4x32xf32>
    %cst_134 = arith.constant 1.000000e+00 : f32
    %457 = vector.broadcast %cst_134 : f32 to vector<4x32xf32>
    %458 = arith.subf %457, %451 : vector<4x32xf32>
    %459 = arith.mulf %458, %456 : vector<4x32xf32>
    %460 = arith.mulf %451, %398 : vector<4x32xf32>
    %461 = arith.addf %459, %460 : vector<4x32xf32>
    %462 = vector.shape_cast %400 : vector<4x1xi1> to vector<4x1xi1>
    %463 = vector.broadcast %462 : vector<4x1xi1> to vector<4x32xi1>
    %464 = arith.select %463, %461, %398 : vector<4x32xi1>, vector<4x32xf32>
    %cst_135 = arith.constant 7.000000e+00 : f32
    %465 = vector.broadcast %cst_135 : f32 to vector<4x1xf32>
    %466 = arith.cmpf ogt, %0, %465 : vector<4x1xf32>
    %c0_136 = arith.constant 0 : index
    %c7 = arith.constant 7 : index
    %c0_137 = arith.constant 0 : index
    %467 = vector.load %arg0[%c0_136, %c7, %c0_137] : memref<4x8x8xf32, #tpu.memory_space<vmem>>, vector<4x1x8xf32>
    %468 = vector.shape_cast %467 : vector<4x1x8xf32> to vector<4x8xf32>
    %469 = tpu.concatenate %433, %468 in 1 : vector<4x32xf32>, vector<4x8xf32> -> vector<4x40xf32>
    %c0_138 = arith.constant 0 : index
    %c0_139 = arith.constant 0 : index
    %470 = vector.load %arg1[%c0_138, %c0_139] : memref<40x128xf32, #tpu.memory_space<vmem>>, vector<40x128xf32>
    %cst_140 = arith.constant dense<0.000000e+00> : vector<4x128xf32>
    %471 = tpu.matmul %469, %470, %cst_140 {dimension_numbers = #tpu.dot_dimension_numbers<[1], [0], [0], [1], [0, 0, 1, 1], [], []>} : vector<4x40xf32>, vector<40x128xf32>, vector<4x128xf32> -> vector<4x128xf32>
    %c0_141 = arith.constant 0 : index
    %c0_142 = arith.constant 0 : index
    %472 = vector.load %arg3[%c0_141, %c0_142] : memref<64x128xf32, #tpu.memory_space<vmem>>, vector<1x128xf32>
    %473 = vector.broadcast %472 : vector<1x128xf32> to vector<4x128xf32>
    %474 = arith.addf %471, %473 : vector<4x128xf32>
    %475 = vector.extract_strided_slice %474 {offsets = [0, 0], sizes = [4, 32], strides = [1, 1]} : vector<4x128xf32> to vector<4x32xf32>
    %476 = arith.negf %475 : vector<4x32xf32>
    %477 = math.exp %476 : vector<4x32xf32>
    %cst_143 = arith.constant 1.000000e+00 : f32
    %478 = vector.broadcast %cst_143 : f32 to vector<4x32xf32>
    %479 = arith.addf %478, %477 : vector<4x32xf32>
    %480 = arith.divf %478, %479 : vector<4x32xf32>
    %481 = vector.extract_strided_slice %474 {offsets = [0, 32], sizes = [4, 32], strides = [1, 1]} : vector<4x128xf32> to vector<4x32xf32>
    %482 = arith.negf %481 : vector<4x32xf32>
    %483 = math.exp %482 : vector<4x32xf32>
    %cst_144 = arith.constant 1.000000e+00 : f32
    %484 = vector.broadcast %cst_144 : f32 to vector<4x32xf32>
    %485 = arith.addf %484, %483 : vector<4x32xf32>
    %486 = arith.divf %484, %485 : vector<4x32xf32>
    %487 = vector.extract_strided_slice %474 {offsets = [0, 64], sizes = [4, 32], strides = [1, 1]} : vector<4x128xf32> to vector<4x32xf32>
    %488 = vector.extract_strided_slice %474 {offsets = [0, 96], sizes = [4, 32], strides = [1, 1]} : vector<4x128xf32> to vector<4x32xf32>
    %489 = arith.mulf %480, %488 : vector<4x32xf32>
    %490 = arith.addf %487, %489 : vector<4x32xf32>
    %491 = math.tanh %490 : vector<4x32xf32>
    %cst_145 = arith.constant 1.000000e+00 : f32
    %492 = vector.broadcast %cst_145 : f32 to vector<4x32xf32>
    %493 = arith.subf %492, %486 : vector<4x32xf32>
    %494 = arith.mulf %493, %491 : vector<4x32xf32>
    %495 = arith.mulf %486, %433 : vector<4x32xf32>
    %496 = arith.addf %494, %495 : vector<4x32xf32>
    %497 = vector.shape_cast %466 : vector<4x1xi1> to vector<4x1xi1>
    %498 = vector.broadcast %497 : vector<4x1xi1> to vector<4x32xi1>
    %499 = arith.select %498, %496, %433 : vector<4x32xi1>, vector<4x32xf32>
    %500 = tpu.concatenate %464, %499 in 1 : vector<4x32xf32>, vector<4x32xf32> -> vector<4x64xf32>
    %c0_146 = arith.constant 0 : index
    %c0_147 = arith.constant 0 : index
    %501 = vector.load %arg2[%c0_146, %c0_147] : memref<64x128xf32, #tpu.memory_space<vmem>>, vector<64x128xf32>
    %cst_148 = arith.constant dense<0.000000e+00> : vector<4x128xf32>
    %502 = tpu.matmul %500, %501, %cst_148 {dimension_numbers = #tpu.dot_dimension_numbers<[1], [0], [0], [1], [0, 0, 1, 1], [], []>} : vector<4x64xf32>, vector<64x128xf32>, vector<4x128xf32> -> vector<4x128xf32>
    %c1_149 = arith.constant 1 : index
    %c0_150 = arith.constant 0 : index
    %503 = vector.load %arg3[%c1_149, %c0_150] : memref<64x128xf32, #tpu.memory_space<vmem>>, vector<1x128xf32>
    %504 = vector.broadcast %503 : vector<1x128xf32> to vector<4x128xf32>
    %505 = arith.addf %502, %504 : vector<4x128xf32>
    %506 = vector.extract_strided_slice %505 {offsets = [0, 0], sizes = [4, 32], strides = [1, 1]} : vector<4x128xf32> to vector<4x32xf32>
    %507 = arith.negf %506 : vector<4x32xf32>
    %508 = math.exp %507 : vector<4x32xf32>
    %cst_151 = arith.constant 1.000000e+00 : f32
    %509 = vector.broadcast %cst_151 : f32 to vector<4x32xf32>
    %510 = arith.addf %509, %508 : vector<4x32xf32>
    %511 = arith.divf %509, %510 : vector<4x32xf32>
    %512 = vector.extract_strided_slice %505 {offsets = [0, 32], sizes = [4, 32], strides = [1, 1]} : vector<4x128xf32> to vector<4x32xf32>
    %513 = arith.negf %512 : vector<4x32xf32>
    %514 = math.exp %513 : vector<4x32xf32>
    %cst_152 = arith.constant 1.000000e+00 : f32
    %515 = vector.broadcast %cst_152 : f32 to vector<4x32xf32>
    %516 = arith.addf %515, %514 : vector<4x32xf32>
    %517 = arith.divf %515, %516 : vector<4x32xf32>
    %518 = vector.extract_strided_slice %505 {offsets = [0, 64], sizes = [4, 32], strides = [1, 1]} : vector<4x128xf32> to vector<4x32xf32>
    %519 = vector.extract_strided_slice %505 {offsets = [0, 96], sizes = [4, 32], strides = [1, 1]} : vector<4x128xf32> to vector<4x32xf32>
    %520 = arith.mulf %511, %519 : vector<4x32xf32>
    %521 = arith.addf %518, %520 : vector<4x32xf32>
    %522 = math.tanh %521 : vector<4x32xf32>
    %cst_153 = arith.constant 1.000000e+00 : f32
    %523 = vector.broadcast %cst_153 : f32 to vector<4x32xf32>
    %524 = arith.subf %523, %517 : vector<4x32xf32>
    %525 = arith.mulf %524, %522 : vector<4x32xf32>
    %526 = arith.mulf %517, %464 : vector<4x32xf32>
    %527 = arith.addf %525, %526 : vector<4x32xf32>
    %528 = vector.shape_cast %466 : vector<4x1xi1> to vector<4x1xi1>
    %529 = vector.broadcast %528 : vector<4x1xi1> to vector<4x32xi1>
    %530 = arith.select %529, %527, %464 : vector<4x32xi1>, vector<4x32xf32>
    %cst_154 = arith.constant dense<0.000000e+00> : vector<32xf32>
    %531 = vector.multi_reduction <add>, %530, %cst_154 [0] : vector<4x32xf32> to vector<32xf32>
    %532 = vector.shape_cast %531 : vector<32xf32> to vector<1x32xf32>
    %cst_155 = arith.constant 4.000000e+00 : f32
    %533 = vector.broadcast %cst_155 : f32 to vector<1x32xf32>
    %534 = arith.divf %532, %533 : vector<1x32xf32>
    %535 = vector.broadcast %534 : vector<1x32xf32> to vector<4x32xf32>
    %536 = arith.subf %530, %535 : vector<4x32xf32>
    %537 = arith.mulf %536, %536 : vector<4x32xf32>
    %cst_156 = arith.constant dense<0.000000e+00> : vector<32xf32>
    %538 = vector.multi_reduction <add>, %537, %cst_156 [0] : vector<4x32xf32> to vector<32xf32>
    %539 = vector.shape_cast %538 : vector<32xf32> to vector<1x32xf32>
    %cst_157 = arith.constant 4.000000e+00 : f32
    %540 = vector.broadcast %cst_157 : f32 to vector<1x32xf32>
    %541 = arith.divf %539, %540 : vector<1x32xf32>
    %c2_158 = arith.constant 2 : index
    %c0_159 = arith.constant 0 : index
    %542 = vector.load %arg3[%c2_158, %c0_159] : memref<64x128xf32, #tpu.memory_space<vmem>>, vector<1x32xf32>
    %c3_160 = arith.constant 3 : index
    %c0_161 = arith.constant 0 : index
    %543 = vector.load %arg3[%c3_160, %c0_161] : memref<64x128xf32, #tpu.memory_space<vmem>>, vector<1x32xf32>
    %544 = vector.broadcast %534 : vector<1x32xf32> to vector<4x32xf32>
    %545 = arith.subf %530, %544 : vector<4x32xf32>
    %cst_162 = arith.constant 9.99999974E-6 : f32
    %546 = vector.broadcast %cst_162 : f32 to vector<1x32xf32>
    %547 = arith.addf %541, %546 : vector<1x32xf32>
    %548 = math.rsqrt %547 : vector<1x32xf32>
    %549 = vector.broadcast %548 : vector<1x32xf32> to vector<4x32xf32>
    %550 = arith.mulf %545, %549 : vector<4x32xf32>
    %551 = vector.broadcast %542 : vector<1x32xf32> to vector<4x32xf32>
    %552 = arith.mulf %550, %551 : vector<4x32xf32>
    %553 = vector.broadcast %543 : vector<1x32xf32> to vector<4x32xf32>
    %554 = arith.addf %552, %553 : vector<4x32xf32>
    %c16 = arith.constant 16 : index
    %c0_163 = arith.constant 0 : index
    %555 = vector.load %arg3[%c16, %c0_163] : memref<64x128xf32, #tpu.memory_space<vmem>>, vector<4x8xf32>
    %c24 = arith.constant 24 : index
    %c0_164 = arith.constant 0 : index
    %556 = vector.load %arg3[%c24, %c0_164] : memref<64x128xf32, #tpu.memory_space<vmem>>, vector<32x4xf32>
    %c56 = arith.constant 56 : index
    %c0_165 = arith.constant 0 : index
    %557 = vector.load %arg3[%c56, %c0_165] : memref<64x128xf32, #tpu.memory_space<vmem>>, vector<8x4xf32>
    %c4_166 = arith.constant 4 : index
    %c0_167 = arith.constant 0 : index
    %558 = vector.load %arg3[%c4_166, %c0_167] : memref<64x128xf32, #tpu.memory_space<vmem>>, vector<1x4xf32>
    %cst_168 = arith.constant dense<0.000000e+00> : vector<4x4xf32>
    %559 = tpu.matmul %554, %556, %cst_168 {dimension_numbers = #tpu.dot_dimension_numbers<[1], [0], [0], [1], [0, 0, 1, 1], [], []>} : vector<4x32xf32>, vector<32x4xf32>, vector<4x4xf32> -> vector<4x4xf32>
    %cst_169 = arith.constant dense<0.000000e+00> : vector<4x4xf32>
    %560 = tpu.matmul %555, %557, %cst_169 {dimension_numbers = #tpu.dot_dimension_numbers<[1], [0], [0], [1], [0, 0, 1, 1], [], []>} : vector<4x8xf32>, vector<8x4xf32>, vector<4x4xf32> -> vector<4x4xf32>
    %561 = arith.addf %559, %560 : vector<4x4xf32>
    %562 = vector.broadcast %558 : vector<1x4xf32> to vector<4x4xf32>
    %563 = arith.addf %561, %562 : vector<4x4xf32>
    %c0_170 = arith.constant 0 : index
    %c0_171 = arith.constant 0 : index
    %564 = vector.load %arg4[%c0_170, %c0_171] : memref<4x4xf32, #tpu.memory_space<vmem>>, vector<4x4xf32>
    tpu.vector_store %arg4[%c0_170, %c0_171], %563 {strides = array<i32>} : memref<4x4xf32, #tpu.memory_space<vmem>>, vector<4x4xf32>,
    return
  }
}

</mosaic_0001>

<llo_original>
// kernel: tpu_custom_call.1
$region0: #{tpu_custom_call.1}
  #allocation0 [shape = 'u32[]', space=smem, size = 0x4, offset = 0x4, fixed_abs, tag = 'smem constant byte address 0x4 - core index']
  #allocation1 [shape = 'u32[144,128]{1,0:T(1,128)}', space=vmem, size = 0x12000, scoped, tag = 'internal scratch']
  %s0 = inlined_call_operand.hbm [shape: f32[4,8,8], index: 0, kind: input, shape index: {}]
  %s1 = inlined_call_operand.hbm [shape: f32[40,128], index: 1, kind: input, shape index: {}]
  %s2 = inlined_call_operand.hbm [shape: f32[64,128], index: 2, kind: input, shape index: {}]
  %s3 = inlined_call_operand.hbm [shape: f32[64,128], index: 3, kind: input, shape index: {}]
  %s4 = inlined_call_operand.hbm [shape: f32[4,4], index: 4, kind: output, shape index: {}]
  %s5 = sld [smem:[#allocation0]]
  $region42: #{tpu_custom_call.1} parent=0
    _
  %s7 = ssub.s32 1, %s5
  %s8 = scalar_select 0, %s7, %s5
  $region1: #{tpu_custom_call.1} parent=0
    #allocation2 [shape = 'u8[16384]{0}', space=vmem, size = 0x4000, scoped, tag = 'input window, operand 0, single buffered']
    #allocation3 [shape = 's32[1]{0}', space=sflag, size = 0x4, scoped, tag = 'scoped memory for tpu_custom_call.1']
    #allocation4 [shape = 's32[1]{0}', space=sflag, size = 0x4, scoped, tag = 'scoped memory for tpu_custom_call.1']
    #allocation5 [shape = 'u8[20480]{0}', space=vmem, size = 0x5000, scoped, tag = 'input window, operand 1, single buffered']
    #allocation6 [shape = 's32[1]{0}', space=sflag, size = 0x4, scoped, tag = 'scoped memory for tpu_custom_call.1']
    #allocation7 [shape = 'u8[32768]{0}', space=vmem, size = 0x8000, scoped, tag = 'input window, operand 2, single buffered']
    #allocation8 [shape = 'u8[32768]{0}', space=vmem, size = 0x8000, scoped, tag = 'input window, operand 3, single buffered']
    #allocation9 [shape = 's32[1]{0}', space=sflag, size = 0x4, scoped, tag = 'scoped memory for tpu_custom_call.1']
    #allocation10 [shape = 'u8[2048]{0}', space=vmem, size = 0x800, scoped, tag = 'output window, operand 0, single buffered']
    %9 = vsyncpa [#allocation3], 0
    %10 = vsyncpa [#allocation6], 0
    %11 = vsyncpa [#allocation9], 0
    %12 = vsyncpa [#allocation4], 0
    // Predicated region
    $region2: #{tpu_custom_call.1} parent=1 // pred_check
      _
    $region3: #{tpu_custom_call.1} parent=1 // pred_check_branch
      %14 = sbr.rel (0) target = $region5
    $region4: #{tpu_custom_call.1} parent=1 // pred_region
      %s16 = ssub.s32 512, 512
      %17 = vsyncadd [#allocation3], %s16
      %s18 = sshll.u32 [#allocation2], 4
      %s19 = int_to_ptr.vmem [resolvable:$true] %s18
      %24 = dma.hbm_to_vmem [thread:$0]  %s0, 512, %s19, [#allocation3], 128, 128, 8
    $region5: #{tpu_custom_call.1} parent=1 // pred_fallthru
      _
    // Predicated region
    $region6: #{tpu_custom_call.1} parent=1 // pred_check
      _
    $region7: #{tpu_custom_call.1} parent=1 // pred_check_branch
      %26 = sbr.rel (0) target = $region9
    $region8: #{tpu_custom_call.1} parent=1 // pred_region
      %s28 = ssub.s32 640, 640
      %29 = vsyncadd [#allocation6], %s28
      %s30 = sshll.u32 [#allocation5], 4
      %s31 = int_to_ptr.vmem [resolvable:$true] %s30
      %36 = dma.hbm_to_vmem [thread:$0]  %s1, 640, %s31, [#allocation6], 128, 128, 8
    $region9: #{tpu_custom_call.1} parent=1 // pred_fallthru
      _
    // Predicated region
    $region10: #{tpu_custom_call.1} parent=1 // pred_check
      _
    $region11: #{tpu_custom_call.1} parent=1 // pred_check_branch
      %38 = sbr.rel (0) target = $region13
    $region12: #{tpu_custom_call.1} parent=1 // pred_region
      %s40 = ssub.s32 1024, 1024
      %41 = vsyncadd [#allocation6], %s40
      %s42 = sshll.u32 [#allocation7], 4
      %s43 = int_to_ptr.vmem [resolvable:$true] %s42
      %48 = dma.hbm_to_vmem [thread:$0]  %s2, 1024, %s43, [#allocation6], 128, 128, 8
    $region13: #{tpu_custom_call.1} parent=1 // pred_fallthru
      _
    // Predicated region
    $region14: #{tpu_custom_call.1} parent=1 // pred_check
      _
    $region15: #{tpu_custom_call.1} parent=1 // pred_check_branch
      %50 = sbr.rel (0) target = $region17
    $region16: #{tpu_custom_call.1} parent=1 // pred_region
      %s52 = ssub.s32 1024, 1024
      %53 = vsyncadd [#allocation9], %s52
      %s54 = sshll.u32 [#allocation8], 4
      %s55 = int_to_ptr.vmem [resolvable:$true] %s54
      %60 = dma.hbm_to_vmem [thread:$0]  %s3, 1024, %s55, [#allocation9], 128, 128, 8
    $region17: #{tpu_custom_call.1} parent=1 // pred_fallthru
      _
    // Predicated region
    $region18: #{tpu_custom_call.1} parent=1 // pred_check
      _
    $region19: #{tpu_custom_call.1} parent=1 // pred_check_branch
      %62 = sbr.rel (0) target = $region21
    $region20: #{tpu_custom_call.1} parent=1 // pred_region
      %63 = dma.done [#allocation3], 512
    $region21: #{tpu_custom_call.1} parent=1 // pred_fallthru
      _
    // Predicated region
    $region22: #{tpu_custom_call.1} parent=1 // pred_check
      _
    $region23: #{tpu_custom_call.1} parent=1 // pred_check_branch
      %65 = sbr.rel (0) target = $region25
    $region24: #{tpu_custom_call.1} parent=1 // pred_region
      %66 = dma.done [#allocation6], 640
    $region25: #{tpu_custom_call.1} parent=1 // pred_fallthru
      _
    // Predicated region
    $region26: #{tpu_custom_call.1} parent=1 // pred_check
      _
    $region27: #{tpu_custom_call.1} parent=1 // pred_check_branch
      %68 = sbr.rel (0) target = $region29
    $region28: #{tpu_custom_call.1} parent=1 // pred_region
      %69 = dma.done [#allocation6], 1024
    $region29: #{tpu_custom_call.1} parent=1 // pred_fallthru
      _
    // Predicated region
    $region30: #{tpu_custom_call.1} parent=1 // pred_check
      _
    $region31: #{tpu_custom_call.1} parent=1 // pred_check_branch
      %71 = sbr.rel (0) target = $region33
    $region32: #{tpu_custom_call.1} parent=1 // pred_region
      %72 = dma.done [#allocation9], 1024
    $region33: #{tpu_custom_call.1} parent=1 // pred_fallthru
      _
    %v73 = vld [vmem:[#allocation8 + $0x8] sm:$0xf]
    %vm74 = vcmp.gt.f32.partialorder %v73, 0.0
    %v75 = vld [vmem:[#allocation2] sm:$0x1]
    %v76 = vld [vmem:[#allocation2 + $0x8] sm:$0x1]
    %v77 = vld [vmem:[#allocation2 + $0x10] sm:$0x1]
    %v78 = vld [vmem:[#allocation2 + $0x18] sm:$0x1]
    %v83 = vrot.slane %v76, 7
    %vm84 = vcmask 1041409
    %v85 = vsel %vm84, %v83, %v75
    %v86 = vrot.slane %v77, 6
    %vm87 = vcmask 1042434
    %v88 = vsel %vm87, %v86, %v85
    %v89 = vrot.slane %v78, 5
    %vm90 = vcmask 1043459
    %v91 = vsel %vm90, %v89, %v88
    %92 = vrot.lane.b32.xlu0 %v91, 32
    %v93 = vpop.permute.xlu0 %92
    %vm95 = vcmask 261120
    %v96 = vsel %vm95, 0.0, %v93
    %v97 = vld [vmem:[#allocation5] sm:$0xff]
    %v98 = vld [vmem:[#allocation5 + $0x8] sm:$0xff]
    %v99 = vld [vmem:[#allocation5 + $0x10] sm:$0xff]
    %v100 = vld [vmem:[#allocation5 + $0x18] sm:$0xff]
    %v101 = vld [vmem:[#allocation5 + $0x20] sm:$0xff]
    %v102 = vld [vmem:[#allocation8] sm:$0x1]
    %v103 = vlaneseq
    %v104 = vshrl.u32 %v103, 7
    %v105 = vsub.s32 0, %v104
    %v106 = vrot.slane %v102, %v105
    %vm107 = vcmask 326656
    %v109 = vsel %vm107, %v96, 0
    %111 = vmatprep.subr.mxu0 0.0
    %112 = vmatpush1.msra.mxu0 %v97
    %113 = vmatprep.subr.mxu0 0.0
    %114 = vmatpush1.msra.mxu0 %v98
    %115 = vmatprep.subr.mxu0 0.0
    %116 = vmatpush1.msra.mxu0 %v99
    %117 = vmatprep.subr.mxu0 0.0
    %118 = vmatpush1.msra.mxu0 %v100
    %119 = vmatprep.subr.mxu0 0.0
    %120 = vmatpush1.msra.mxu0 %v101
    %121 = vmatprep.subr.mxu0 0.0
    %122 = vmatpush1.msra.mxu0 0.0
    %123 = vmatprep.subr.mxu0 0.0
    %124 = vmatpush1.msra.mxu0 0.0
    %125 = vmatprep.subr.mxu0 0.0
    %126 = vmatpush1.msra.mxu0 0.0
    %127 = vmatprep.subr.mxu0 0.0
    %128 = vmatpush1.msra.mxu0 0.0
    %129 = vmatprep.subr.mxu0 0.0
    %130 = vmatpush1.msra.mxu0 0.0
    %131 = vmatprep.subr.mxu0 0.0
    %132 = vmatpush1.msra.mxu0 0.0
    %133 = vmatprep.subr.mxu0 0.0
    %134 = vmatpush1.msra.mxu0 0.0
    %135 = vmatprep.subr.mxu0 0.0
    %136 = vmatpush1.msra.mxu0 0.0
    %137 = vmatprep.subr.mxu0 0.0
    %138 = vmatpush1.msra.mxu0 0.0
    %139 = vmatprep.subr.mxu0 0.0
    %140 = vmatpush1.msra.mxu0 0.0
    %141 = vmatprep.subr.mxu0 0.0
    %142 = vmatpush1.msra.mxu0 0.0
    %143 = vmatprep.subr.mxu0 0.0
    %144 = vmatpush1.msra.mxu0 0.0
    %145 = vmatprep.subr.mxu0 0.0
    %146 = vmatpush1.msra.mxu0 0.0
    %147 = vmatprep.subr.mxu0 0.0
    %148 = vmatpush1.msra.mxu0 0.0
    %149 = vmatprep.subr.mxu0 0.0
    %150 = vmatpush1.msra.mxu0 0.0
    %151 = vmatprep.subr.mxu0 0.0
    %152 = vmatpush1.msra.mxu0 0.0
    %153 = vmatprep.subr.mxu0 0.0
    %154 = vmatpush1.msra.mxu0 0.0
    %155 = vmatprep.subr.mxu0 0.0
    %156 = vmatpush1.msra.mxu0 0.0
    %157 = vmatprep.subr.mxu0 0.0
    %158 = vmatpush1.msra.mxu0 0.0
    %159 = vmatprep.subr.mxu0 0.0
    %160 = vmatpush1.msra.mxu0 0.0
    %161 = vmatprep.subr.mxu0 0.0
    %162 = vmatpush1.msra.mxu0 0.0
    %163 = vmatprep.subr.mxu0 0.0
    %164 = vmatpush1.msra.mxu0 0.0
    %165 = vmatprep.subr.mxu0 0.0
    %166 = vmatpush1.msra.mxu0 0.0
    %167 = vmatprep.subr.mxu0 0.0
    %168 = vmatpush1.msra.mxu0 0.0
    %169 = vmatprep.subr.mxu0 0.0
    %170 = vmatpush1.msra.mxu0 0.0
    %171 = vmatprep.subr.mxu0 0.0
    %172 = vmatpush1.msra.mxu0 0.0
    %173 = vmatprep.subr.mxu0 0.0
    %174 = vmatpush1.msra.mxu0 0.0
    %175 = vmatprep.mubr.f32.mxu0 0.0
    %176 = vmatmul.mubr.f32.gmra.mrb[0].mxu0 %v109
    %v177 = vpop.f32.mrb[0].mxu0
    %v178 = vadd.f32 %v106, %v177
    %v179 = vpop.f32.mrb[0].mxu0
    %180 = vdwg.mxu0
    %v181 = vxor.u32 %v178, 2147483648
    %v182 = vmul.f32 %v181, 1.442695
    %v183 = vpow.pop %v182
    %v184 = vadd.f32 %v183, 1.0
    %v185 = vrcp.pop %v184
    %v186 = vmul.f32 1.0, %v185
    %188 = vrot.lane.b32.xlu0 %v178, 32
    %v189 = vpop.permute.xlu0 %188
    %v191 = vmul.f32 %v186, %v189
    %193 = vrot.lane.b32.xlu0 %v191, 64
    %v194 = vpop.permute.xlu0 %193
    %v196 = vadd.f32 %v178, %v194
    %v197 = vtanh.pop %v196
    %v198 = vsub.f32 1.0, %v186
    %200 = vrot.lane.b32.xlu0 %v197, 96
    %v201 = vpop.permute.xlu0 %200
    %v203 = vmul.f32 %v198, %v201
    %v204 = vmul.f32 %v186, 0.0
    %v205 = vadd.f32 %v203, %v204
    %v206 = vsel %vm74, 1, 0
    %207 = vset.pattern.permute.xlu0 0
    %208 = vperm.xlu0 %207, %v206
    %v209 = vpop.permute.xlu0 %208
    %vm210 = vcmp.eq.s32.totalorder %v209, 1
    %v211 = vsel %vm210, %v205, 0.0
    %v212 = vsel %vm95, 0.0, %v211
    %v213 = vld [vmem:[#allocation7] sm:$0xff]
    %v214 = vld [vmem:[#allocation7 + $0x8] sm:$0xff]
    %v215 = vld [vmem:[#allocation7 + $0x10] sm:$0xff]
    %v216 = vld [vmem:[#allocation7 + $0x18] sm:$0xff]
    %v217 = vld [vmem:[#allocation7 + $0x20] sm:$0xff]
    %v218 = vld [vmem:[#allocation7 + $0x28] sm:$0xff]
    %v219 = vld [vmem:[#allocation7 + $0x30] sm:$0xff]
    %v220 = vld [vmem:[#allocation7 + $0x38] sm:$0xff]
    %v221 = vld [vmem:[#allocation8 + $0x1] sm:$0x1]
    %v222 = vlaneseq
    %v223 = vshrl.u32 %v222, 7
    %v224 = vsub.s32 0, %v223
    %v225 = vrot.slane %v221, %v224
    %vm226 = vcmask 523264
    %v228 = vsel %vm226, %v212, 0
    %230 = vmatprep.subr.mxu0 0.0
    %231 = vmatpush1.msra.mxu0 %v213
    %232 = vmatprep.subr.mxu0 0.0
    %233 = vmatpush1.msra.mxu0 %v214
    %234 = vmatprep.subr.mxu0 0.0
    %235 = vmatpush1.msra.mxu0 %v215
    %236 = vmatprep.subr.mxu0 0.0
    %237 = vmatpush1.msra.mxu0 %v216
    %238 = vmatprep.subr.mxu0 0.0
    %239 = vmatpush1.msra.mxu0 %v217
    %240 = vmatprep.subr.mxu0 0.0
    %241 = vmatpush1.msra.mxu0 %v218
    %242 = vmatprep.subr.mxu0 0.0
    %243 = vmatpush1.msra.mxu0 %v219
    %244 = vmatprep.subr.mxu0 0.0
    %245 = vmatpush1.msra.mxu0 %v220
    %246 = vmatprep.subr.mxu0 0.0
    %247 = vmatpush1.msra.mxu0 0.0
    %248 = vmatprep.subr.mxu0 0.0
    %249 = vmatpush1.msra.mxu0 0.0
    %250 = vmatprep.subr.mxu0 0.0
    %251 = vmatpush1.msra.mxu0 0.0
    %252 = vmatprep.subr.mxu0 0.0
    %253 = vmatpush1.msra.mxu0 0.0
    %254 = vmatprep.subr.mxu0 0.0
    %255 = vmatpush1.msra.mxu0 0.0
    %256 = vmatprep.subr.mxu0 0.0
    %257 = vmatpush1.msra.mxu0 0.0
    %258 = vmatprep.subr.mxu0 0.0
    %259 = vmatpush1.msra.mxu0 0.0
    %260 = vmatprep.subr.mxu0 0.0
    %261 = vmatpush1.msra.mxu0 0.0
    %262 = vmatprep.subr.mxu0 0.0
    %263 = vmatpush1.msra.mxu0 0.0
    %264 = vmatprep.subr.mxu0 0.0
    %265 = vmatpush1.msra.mxu0 0.0
    %266 = vmatprep.subr.mxu0 0.0
    %267 = vmatpush1.msra.mxu0 0.0
    %268 = vmatprep.subr.mxu0 0.0
    %269 = vmatpush1.msra.mxu0 0.0
    %270 = vmatprep.subr.mxu0 0.0
    %271 = vmatpush1.msra.mxu0 0.0
    %272 = vmatprep.subr.mxu0 0.0
    %273 = vmatpush1.msra.mxu0 0.0
    %274 = vmatprep.subr.mxu0 0.0
    %275 = vmatpush1.msra.mxu0 0.0
    %276 = vmatprep.subr.mxu0 0.0
    %277 = vmatpush1.msra.mxu0 0.0
    %278 = vmatprep.subr.mxu0 0.0
    %279 = vmatpush1.msra.mxu0 0.0
    %280 = vmatprep.subr.mxu0 0.0
    %281 = vmatpush1.msra.mxu0 0.0
    %282 = vmatprep.subr.mxu0 0.0
    %283 = vmatpush1.msra.mxu0 0.0
    %284 = vmatprep.subr.mxu0 0.0
    %285 = vmatpush1.msra.mxu0 0.0
    %286 = vmatprep.subr.mxu0 0.0
    %287 = vmatpush1.msra.mxu0 0.0
    %288 = vmatprep.subr.mxu0 0.0
    %289 = vmatpush1.msra.mxu0 0.0
    %290 = vmatprep.subr.mxu0 0.0
    %291 = vmatpush1.msra.mxu0 0.0
    %292 = vmatprep.subr.mxu0 0.0
    %293 = vmatpush1.msra.mxu0 0.0
    %294 = vmatprep.mubr.f32.mxu0 0.0
    %295 = vmatmul.mubr.f32.gmra.mrb[0].mxu0 %v228
    %v296 = vpop.f32.mrb[0].mxu0
    %v297 = vadd.f32 %v225, %v296
    %v298 = vpop.f32.mrb[0].mxu0
    %299 = vdwg.mxu0
    %v300 = vxor.u32 %v297, 2147483648
    %v301 = vmul.f32 %v300, 1.442695
    %v302 = vpow.pop %v301
    %v303 = vadd.f32 %v302, 1.0
    %v304 = vrcp.pop %v303
    %v305 = vmul.f32 1.0, %v304
    %307 = vrot.lane.b32.xlu0 %v297, 32
    %v308 = vpop.permute.xlu0 %307
    %v310 = vmul.f32 %v305, %v308
    %312 = vrot.lane.b32.xlu0 %v310, 64
    %v313 = vpop.permute.xlu0 %312
    %v315 = vadd.f32 %v297, %v313
    %v316 = vtanh.pop %v315
    %v317 = vsub.f32 1.0, %v305
    %319 = vrot.lane.b32.xlu0 %v316, 96
    %v320 = vpop.permute.xlu0 %319
    %v322 = vmul.f32 %v317, %v320
    %v323 = vmul.f32 %v305, 0.0
    %v324 = vadd.f32 %v322, %v323
    %v325 = vsel %vm210, %v324, 0.0
    %vm326 = vcmp.gt.f32.partialorder %v73, 1.0
    %v327 = vld [vmem:[#allocation2 + $0x1] sm:$0x1]
    %v328 = vld [vmem:[#allocation2 + $0x9] sm:$0x1]
    %v329 = vld [vmem:[#allocation2 + $0x11] sm:$0x1]
    %v330 = vld [vmem:[#allocation2 + $0x19] sm:$0x1]
    %332 = vrot.lane.b32.xlu0 %v211, 96
    %v333 = vpop.permute.xlu0 %332
    %v339 = vrot.slane %v328, 7
    %v340 = vsel %vm84, %v339, %v327
    %v341 = vrot.slane %v329, 6
    %v342 = vsel %vm87, %v341, %v340
    %v343 = vrot.slane %v330, 5
    %v344 = vsel %vm90, %v343, %v342
    %345 = vrot.lane.b32.xlu0 %v344, 32
    %v346 = vpop.permute.xlu0 %345
    %v348 = vsel %vm95, %v333, %v346
    %v350 = vsel %vm107, %v348, 0
    %352 = vmatprep.subr.mxu0 0.0
    %353 = vmatpush1.msra.mxu0 %v97
    %354 = vmatprep.subr.mxu0 0.0
    %355 = vmatpush1.msra.mxu0 %v98
    %356 = vmatprep.subr.mxu0 0.0
    %357 = vmatpush1.msra.mxu0 %v99
    %358 = vmatprep.subr.mxu0 0.0
    %359 = vmatpush1.msra.mxu0 %v100
    %360 = vmatprep.subr.mxu0 0.0
    %361 = vmatpush1.msra.mxu0 %v101
    %362 = vmatprep.subr.mxu0 0.0
    %363 = vmatpush1.msra.mxu0 0.0
    %364 = vmatprep.subr.mxu0 0.0
    %365 = vmatpush1.msra.mxu0 0.0
    %366 = vmatprep.subr.mxu0 0.0
    %367 = vmatpush1.msra.mxu0 0.0
    %368 = vmatprep.subr.mxu0 0.0
    %369 = vmatpush1.msra.mxu0 0.0
    %370 = vmatprep.subr.mxu0 0.0
    %371 = vmatpush1.msra.mxu0 0.0
    %372 = vmatprep.subr.mxu0 0.0
    %373 = vmatpush1.msra.mxu0 0.0
    %374 = vmatprep.subr.mxu0 0.0
    %375 = vmatpush1.msra.mxu0 0.0
    %376 = vmatprep.subr.mxu0 0.0
    %377 = vmatpush1.msra.mxu0 0.0
    %378 = vmatprep.subr.mxu0 0.0
    %379 = vmatpush1.msra.mxu0 0.0
    %380 = vmatprep.subr.mxu0 0.0
    %381 = vmatpush1.msra.mxu0 0.0
    %382 = vmatprep.subr.mxu0 0.0
    %383 = vmatpush1.msra.mxu0 0.0
    %384 = vmatprep.subr.mxu0 0.0
    %385 = vmatpush1.msra.mxu0 0.0
    %386 = vmatprep.subr.mxu0 0.0
    %387 = vmatpush1.msra.mxu0 0.0
    %388 = vmatprep.subr.mxu0 0.0
    %389 = vmatpush1.msra.mxu0 0.0
    %390 = vmatprep.subr.mxu0 0.0
    %391 = vmatpush1.msra.mxu0 0.0
    %392 = vmatprep.subr.mxu0 0.0
    %393 = vmatpush1.msra.mxu0 0.0
    %394 = vmatprep.subr.mxu0 0.0
    %395 = vmatpush1.msra.mxu0 0.0
    %396 = vmatprep.subr.mxu0 0.0
    %397 = vmatpush1.msra.mxu0 0.0
    %398 = vmatprep.subr.mxu0 0.0
    %399 = vmatpush1.msra.mxu0 0.0
    %400 = vmatprep.subr.mxu0 0.0
    %401 = vmatpush1.msra.mxu0 0.0
    %402 = vmatprep.subr.mxu0 0.0
    %403 = vmatpush1.msra.mxu0 0.0
    %404 = vmatprep.subr.mxu0 0.0
    %405 = vmatpush1.msra.mxu0 0.0
    %406 = vmatprep.subr.mxu0 0.0
    %407 = vmatpush1.msra.mxu0 0.0
    %408 = vmatprep.subr.mxu0 0.0
    %409 = vmatpush1.msra.mxu0 0.0
    %410 = vmatprep.subr.mxu0 0.0
    %411 = vmatpush1.msra.mxu0 0.0
    %412 = vmatprep.subr.mxu0 0.0
    %413 = vmatpush1.msra.mxu0 0.0
    %414 = vmatprep.subr.mxu0 0.0
    %415 = vmatpush1.msra.mxu0 0.0
    %416 = vmatprep.mubr.f32.mxu0 0.0
    %417 = vmatmul.mubr.f32.gmra.mrb[0].mxu0 %v350
    %v418 = vpop.f32.mrb[0].mxu0
    %v419 = vadd.f32 %v106, %v418
    %v420 = vpop.f32.mrb[0].mxu0
    %421 = vdwg.mxu0
    %v422 = vxor.u32 %v419, 2147483648
    %v423 = vmul.f32 %v422, 1.442695
    %v424 = vpow.pop %v423
    %v425 = vadd.f32 %v424, 1.0
    %v426 = vrcp.pop %v425
    %v427 = vmul.f32 1.0, %v426
    %429 = vrot.lane.b32.xlu0 %v419, 32
    %v430 = vpop.permute.xlu0 %429
    %v432 = vmul.f32 %v427, %v430
    %434 = vrot.lane.b32.xlu0 %v432, 64
    %v435 = vpop.permute.xlu0 %434
    %v437 = vadd.f32 %v419, %v435
    %v438 = vtanh.pop %v437
    %v439 = vsub.f32 1.0, %v427
    %441 = vrot.lane.b32.xlu0 %v438, 96
    %v442 = vpop.permute.xlu0 %441
    %v444 = vmul.f32 %v439, %v442
    %v445 = vmul.f32 %v427, %v211
    %v446 = vadd.f32 %v444, %v445
    %v447 = vsel %vm326, 1, 0
    %448 = vset.pattern.permute.xlu0 0
    %449 = vperm.xlu0 %448, %v447
    %v450 = vpop.permute.xlu0 %449
    %vm451 = vcmp.eq.s32.totalorder %v450, 1
    %v452 = vsel %vm451, %v446, %v211
    %454 = vrot.lane.b32.xlu0 %v325, 96
    %v455 = vpop.permute.xlu0 %454
    %v457 = vsel %vm95, %v455, %v452
    %v459 = vsel %vm226, %v457, 0
    %461 = vmatprep.subr.mxu0 0.0
    %462 = vmatpush1.msra.mxu0 %v213
    %463 = vmatprep.subr.mxu0 0.0
    %464 = vmatpush1.msra.mxu0 %v214
    %465 = vmatprep.subr.mxu0 0.0
    %466 = vmatpush1.msra.mxu0 %v215
    %467 = vmatprep.subr.mxu0 0.0
    %468 = vmatpush1.msra.mxu0 %v216
    %469 = vmatprep.subr.mxu0 0.0
    %470 = vmatpush1.msra.mxu0 %v217
    %471 = vmatprep.subr.mxu0 0.0
    %472 = vmatpush1.msra.mxu0 %v218
    %473 = vmatprep.subr.mxu0 0.0
    %474 = vmatpush1.msra.mxu0 %v219
    %475 = vmatprep.subr.mxu0 0.0
    %476 = vmatpush1.msra.mxu0 %v220
    %477 = vmatprep.subr.mxu0 0.0
    %478 = vmatpush1.msra.mxu0 0.0
    %479 = vmatprep.subr.mxu0 0.0
    %480 = vmatpush1.msra.mxu0 0.0
    %481 = vmatprep.subr.mxu0 0.0
    %482 = vmatpush1.msra.mxu0 0.0
    %483 = vmatprep.subr.mxu0 0.0
    %484 = vmatpush1.msra.mxu0 0.0
    %485 = vmatprep.subr.mxu0 0.0
    %486 = vmatpush1.msra.mxu0 0.0
    %487 = vmatprep.subr.mxu0 0.0
    %488 = vmatpush1.msra.mxu0 0.0
    %489 = vmatprep.subr.mxu0 0.0
    %490 = vmatpush1.msra.mxu0 0.0
    %491 = vmatprep.subr.mxu0 0.0
    %492 = vmatpush1.msra.mxu0 0.0
    %493 = vmatprep.subr.mxu0 0.0
    %494 = vmatpush1.msra.mxu0 0.0
    %495 = vmatprep.subr.mxu0 0.0
    %496 = vmatpush1.msra.mxu0 0.0
    %497 = vmatprep.subr.mxu0 0.0
    %498 = vmatpush1.msra.mxu0 0.0
    %499 = vmatprep.subr.mxu0 0.0
    %500 = vmatpush1.msra.mxu0 0.0
    %501 = vmatprep.subr.mxu0 0.0
    %502 = vmatpush1.msra.mxu0 0.0
    %503 = vmatprep.subr.mxu0 0.0
    %504 = vmatpush1.msra.mxu0 0.0
    %505 = vmatprep.subr.mxu0 0.0
    %506 = vmatpush1.msra.mxu0 0.0
    %507 = vmatprep.subr.mxu0 0.0
    %508 = vmatpush1.msra.mxu0 0.0
    %509 = vmatprep.subr.mxu0 0.0
    %510 = vmatpush1.msra.mxu0 0.0
    %511 = vmatprep.subr.mxu0 0.0
    %512 = vmatpush1.msra.mxu0 0.0
    %513 = vmatprep.subr.mxu0 0.0
    %514 = vmatpush1.msra.mxu0 0.0
    %515 = vmatprep.subr.mxu0 0.0
    %516 = vmatpush1.msra.mxu0 0.0
    %517 = vmatprep.subr.mxu0 0.0
    %518 = vmatpush1.msra.mxu0 0.0
    %519 = vmatprep.subr.mxu0 0.0
    %520 = vmatpush1.msra.mxu0 0.0
    %521 = vmatprep.subr.mxu0 0.0
    %522 = vmatpush1.msra.mxu0 0.0
    %523 = vmatprep.subr.mxu0 0.0
    %524 = vmatpush1.msra.mxu0 0.0
    %525 = vmatprep.mubr.f32.mxu0 0.0
    %526 = vmatmul.mubr.f32.gmra.mrb[0].mxu0 %v459
    %v527 = vpop.f32.mrb[0].mxu0
    %v528 = vadd.f32 %v225, %v527
    %v529 = vpop.f32.mrb[0].mxu0
    %530 = vdwg.mxu0
    %v531 = vxor.u32 %v528, 2147483648
    %v532 = vmul.f32 %v531, 1.442695
    %v533 = vpow.pop %v532
    %v534 = vadd.f32 %v533, 1.0
    %v535 = vrcp.pop %v534
    %v536 = vmul.f32 1.0, %v535
    %538 = vrot.lane.b32.xlu0 %v528, 32
    %v539 = vpop.permute.xlu0 %538
    %v541 = vmul.f32 %v536, %v539
    %543 = vrot.lane.b32.xlu0 %v541, 64
    %v544 = vpop.permute.xlu0 %543
    %v546 = vadd.f32 %v528, %v544
    %v547 = vtanh.pop %v546
    %v548 = vsub.f32 1.0, %v536
    %550 = vrot.lane.b32.xlu0 %v547, 96
    %v551 = vpop.permute.xlu0 %550
    %v553 = vmul.f32 %v548, %v551
    %v554 = vmul.f32 %v536, %v325
    %v555 = vadd.f32 %v553, %v554
    %v556 = vsel %vm451, %v555, %v325
    %vm557 = vcmp.gt.f32.partialorder %v73, 2.0
    %v558 = vld [vmem:[#allocation2 + $0x2] sm:$0x1]
    %v559 = vld [vmem:[#allocation2 + $0xa] sm:$0x1]
    %v560 = vld [vmem:[#allocation2 + $0x12] sm:$0x1]
    %v561 = vld [vmem:[#allocation2 + $0x1a] sm:$0x1]
    %563 = vrot.lane.b32.xlu0 %v452, 96
    %v564 = vpop.permute.xlu0 %563
    %v570 = vrot.slane %v559, 7
    %v571 = vsel %vm84, %v570, %v558
    %v572 = vrot.slane %v560, 6
    %v573 = vsel %vm87, %v572, %v571
    %v574 = vrot.slane %v561, 5
    %v575 = vsel %vm90, %v574, %v573
    %576 = vrot.lane.b32.xlu0 %v575, 32
    %v577 = vpop.permute.xlu0 %576
    %v579 = vsel %vm95, %v564, %v577
    %v581 = vsel %vm107, %v579, 0
    %583 = vmatprep.subr.mxu0 0.0
    %584 = vmatpush1.msra.mxu0 %v97
    %585 = vmatprep.subr.mxu0 0.0
    %586 = vmatpush1.msra.mxu0 %v98
    %587 = vmatprep.subr.mxu0 0.0
    %588 = vmatpush1.msra.mxu0 %v99
    %589 = vmatprep.subr.mxu0 0.0
    %590 = vmatpush1.msra.mxu0 %v100
    %591 = vmatprep.subr.mxu0 0.0
    %592 = vmatpush1.msra.mxu0 %v101
    %593 = vmatprep.subr.mxu0 0.0
    %594 = vmatpush1.msra.mxu0 0.0
    %595 = vmatprep.subr.mxu0 0.0
    %596 = vmatpush1.msra.mxu0 0.0
    %597 = vmatprep.subr.mxu0 0.0
    %598 = vmatpush1.msra.mxu0 0.0
    %599 = vmatprep.subr.mxu0 0.0
    %600 = vmatpush1.msra.mxu0 0.0
    %601 = vmatprep.subr.mxu0 0.0
    %602 = vmatpush1.msra.mxu0 0.0
    %603 = vmatprep.subr.mxu0 0.0
    %604 = vmatpush1.msra.mxu0 0.0
    %605 = vmatprep.subr.mxu0 0.0
    %606 = vmatpush1.msra.mxu0 0.0
    %607 = vmatprep.subr.mxu0 0.0
    %608 = vmatpush1.msra.mxu0 0.0
    %609 = vmatprep.subr.mxu0 0.0
    %610 = vmatpush1.msra.mxu0 0.0
    %611 = vmatprep.subr.mxu0 0.0
    %612 = vmatpush1.msra.mxu0 0.0
    %613 = vmatprep.subr.mxu0 0.0
    %614 = vmatpush1.msra.mxu0 0.0
    %615 = vmatprep.subr.mxu0 0.0
    %616 = vmatpush1.msra.mxu0 0.0
    %617 = vmatprep.subr.mxu0 0.0
    %618 = vmatpush1.msra.mxu0 0.0
    %619 = vmatprep.subr.mxu0 0.0
    %620 = vmatpush1.msra.mxu0 0.0
    %621 = vmatprep.subr.mxu0 0.0
    %622 = vmatpush1.msra.mxu0 0.0
    %623 = vmatprep.subr.mxu0 0.0
    %624 = vmatpush1.msra.mxu0 0.0
    %625 = vmatprep.subr.mxu0 0.0
    %626 = vmatpush1.msra.mxu0 0.0
    %627 = vmatprep.subr.mxu0 0.0
    %628 = vmatpush1.msra.mxu0 0.0
    %629 = vmatprep.subr.mxu0 0.0
    %630 = vmatpush1.msra.mxu0 0.0
    %631 = vmatprep.subr.mxu0 0.0
    %632 = vmatpush1.msra.mxu0 0.0
    %633 = vmatprep.subr.mxu0 0.0
    %634 = vmatpush1.msra.mxu0 0.0
    %635 = vmatprep.subr.mxu0 0.0
    %636 = vmatpush1.msra.mxu0 0.0
    %637 = vmatprep.subr.mxu0 0.0
    %638 = vmatpush1.msra.mxu0 0.0
    %639 = vmatprep.subr.mxu0 0.0
    %640 = vmatpush1.msra.mxu0 0.0
    %641 = vmatprep.subr.mxu0 0.0
    %642 = vmatpush1.msra.mxu0 0.0
    %643 = vmatprep.subr.mxu0 0.0
    %644 = vmatpush1.msra.mxu0 0.0
    %645 = vmatprep.subr.mxu0 0.0
    %646 = vmatpush1.msra.mxu0 0.0
    %647 = vmatprep.mubr.f32.mxu0 0.0
    %648 = vmatmul.mubr.f32.gmra.mrb[0].mxu0 %v581
    %v649 = vpop.f32.mrb[0].mxu0
    %v650 = vadd.f32 %v106, %v649
    %v651 = vpop.f32.mrb[0].mxu0
    %652 = vdwg.mxu0
    %v653 = vxor.u32 %v650, 2147483648
    %v654 = vmul.f32 %v653, 1.442695
    %v655 = vpow.pop %v654
    %v656 = vadd.f32 %v655, 1.0
    %v657 = vrcp.pop %v656
    %v658 = vmul.f32 1.0, %v657
    %660 = vrot.lane.b32.xlu0 %v650, 32
    %v661 = vpop.permute.xlu0 %660
    %v663 = vmul.f32 %v658, %v661
    %665 = vrot.lane.b32.xlu0 %v663, 64
    %v666 = vpop.permute.xlu0 %665
    %v668 = vadd.f32 %v650, %v666
    %v669 = vtanh.pop %v668
    %v670 = vsub.f32 1.0, %v658
    %672 = vrot.lane.b32.xlu0 %v669, 96
    %v673 = vpop.permute.xlu0 %672
    %v675 = vmul.f32 %v670, %v673
    %v676 = vmul.f32 %v658, %v452
    %v677 = vadd.f32 %v675, %v676
    %v678 = vsel %vm557, 1, 0
    %679 = vset.pattern.permute.xlu0 0
    %680 = vperm.xlu0 %679, %v678
    %v681 = vpop.permute.xlu0 %680
    %vm682 = vcmp.eq.s32.totalorder %v681, 1
    %v683 = vsel %vm682, %v677, %v452
    %685 = vrot.lane.b32.xlu0 %v556, 96
    %v686 = vpop.permute.xlu0 %685
    %v688 = vsel %vm95, %v686, %v683
    %v690 = vsel %vm226, %v688, 0
    %692 = vmatprep.subr.mxu0 0.0
    %693 = vmatpush1.msra.mxu0 %v213
    %694 = vmatprep.subr.mxu0 0.0
    %695 = vmatpush1.msra.mxu0 %v214
    %696 = vmatprep.subr.mxu0 0.0
    %697 = vmatpush1.msra.mxu0 %v215
    %698 = vmatprep.subr.mxu0 0.0
    %699 = vmatpush1.msra.mxu0 %v216
    %700 = vmatprep.subr.mxu0 0.0
    %701 = vmatpush1.msra.mxu0 %v217
    %702 = vmatprep.subr.mxu0 0.0
    %703 = vmatpush1.msra.mxu0 %v218
    %704 = vmatprep.subr.mxu0 0.0
    %705 = vmatpush1.msra.mxu0 %v219
    %706 = vmatprep.subr.mxu0 0.0
    %707 = vmatpush1.msra.mxu0 %v220
    %708 = vmatprep.subr.mxu0 0.0
    %709 = vmatpush1.msra.mxu0 0.0
    %710 = vmatprep.subr.mxu0 0.0
    %711 = vmatpush1.msra.mxu0 0.0
    %712 = vmatprep.subr.mxu0 0.0
    %713 = vmatpush1.msra.mxu0 0.0
    %714 = vmatprep.subr.mxu0 0.0
    %715 = vmatpush1.msra.mxu0 0.0
    %716 = vmatprep.subr.mxu0 0.0
    %717 = vmatpush1.msra.mxu0 0.0
    %718 = vmatprep.subr.mxu0 0.0
    %719 = vmatpush1.msra.mxu0 0.0
    %720 = vmatprep.subr.mxu0 0.0
    %721 = vmatpush1.msra.mxu0 0.0
    %722 = vmatprep.subr.mxu0 0.0
    %723 = vmatpush1.msra.mxu0 0.0
    %724 = vmatprep.subr.mxu0 0.0
    %725 = vmatpush1.msra.mxu0 0.0
    %726 = vmatprep.subr.mxu0 0.0
    %727 = vmatpush1.msra.mxu0 0.0
    %728 = vmatprep.subr.mxu0 0.0
    %729 = vmatpush1.msra.mxu0 0.0
    %730 = vmatprep.subr.mxu0 0.0
    %731 = vmatpush1.msra.mxu0 0.0
    %732 = vmatprep.subr.mxu0 0.0
    %733 = vmatpush1.msra.mxu0 0.0
    %734 = vmatprep.subr.mxu0 0.0
    %735 = vmatpush1.msra.mxu0 0.0
    %736 = vmatprep.subr.mxu0 0.0
    %737 = vmatpush1.msra.mxu0 0.0
    %738 = vmatprep.subr.mxu0 0.0
    %739 = vmatpush1.msra.mxu0 0.0
    %740 = vmatprep.subr.mxu0 0.0
    %741 = vmatpush1.msra.mxu0 0.0
    %742 = vmatprep.subr.mxu0 0.0
    %743 = vmatpush1.msra.mxu0 0.0
    %744 = vmatprep.subr.mxu0 0.0
    %745 = vmatpush1.msra.mxu0 0.0
    %746 = vmatprep.subr.mxu0 0.0
    %747 = vmatpush1.msra.mxu0 0.0
    %748 = vmatprep.subr.mxu0 0.0
    %749 = vmatpush1.msra.mxu0 0.0
    %750 = vmatprep.subr.mxu0 0.0
    %751 = vmatpush1.msra.mxu0 0.0
    %752 = vmatprep.subr.mxu0 0.0
    %753 = vmatpush1.msra.mxu0 0.0
    %754 = vmatprep.subr.mxu0 0.0
    %755 = vmatpush1.msra.mxu0 0.0
    %756 = vmatprep.mubr.f32.mxu0 0.0
    %757 = vmatmul.mubr.f32.gmra.mrb[0].mxu0 %v690
    %v758 = vpop.f32.mrb[0].mxu0
    %v759 = vadd.f32 %v225, %v758
    %v760 = vpop.f32.mrb[0].mxu0
    %761 = vdwg.mxu0
    %v762 = vxor.u32 %v759, 2147483648
    %v763 = vmul.f32 %v762, 1.442695
    %v764 = vpow.pop %v763
    %v765 = vadd.f32 %v764, 1.0
    %v766 = vrcp.pop %v765
    %v767 = vmul.f32 1.0, %v766
    %769 = vrot.lane.b32.xlu0 %v759, 32
    %v770 = vpop.permute.xlu0 %769
    %v772 = vmul.f32 %v767, %v770
    %774 = vrot.lane.b32.xlu0 %v772, 64
    %v775 = vpop.permute.xlu0 %774
    %v777 = vadd.f32 %v759, %v775
    %v778 = vtanh.pop %v777
    %v779 = vsub.f32 1.0, %v767
    %781 = vrot.lane.b32.xlu0 %v778, 96
    %v782 = vpop.permute.xlu0 %781
    %v784 = vmul.f32 %v779, %v782
    %v785 = vmul.f32 %v767, %v556
    %v786 = vadd.f32 %v784, %v785
    %v787 = vsel %vm682, %v786, %v556
    %vm788 = vcmp.gt.f32.partialorder %v73, 3.0
    %v789 = vld [vmem:[#allocation2 + $0x3] sm:$0x1]
    %v790 = vld [vmem:[#allocation2 + $0xb] sm:$0x1]
    %v791 = vld [vmem:[#allocation2 + $0x13] sm:$0x1]
    %v792 = vld [vmem:[#allocation2 + $0x1b] sm:$0x1]
    %794 = vrot.lane.b32.xlu0 %v683, 96
    %v795 = vpop.permute.xlu0 %794
    %v801 = vrot.slane %v790, 7
    %v802 = vsel %vm84, %v801, %v789
    %v803 = vrot.slane %v791, 6
    %v804 = vsel %vm87, %v803, %v802
    %v805 = vrot.slane %v792, 5
    %v806 = vsel %vm90, %v805, %v804
    %807 = vrot.lane.b32.xlu0 %v806, 32
    %v808 = vpop.permute.xlu0 %807
    %v810 = vsel %vm95, %v795, %v808
    %v812 = vsel %vm107, %v810, 0
    %814 = vmatprep.subr.mxu0 0.0
    %815 = vmatpush1.msra.mxu0 %v97
    %816 = vmatprep.subr.mxu0 0.0
    %817 = vmatpush1.msra.mxu0 %v98
    %818 = vmatprep.subr.mxu0 0.0
    %819 = vmatpush1.msra.mxu0 %v99
    %820 = vmatprep.subr.mxu0 0.0
    %821 = vmatpush1.msra.mxu0 %v100
    %822 = vmatprep.subr.mxu0 0.0
    %823 = vmatpush1.msra.mxu0 %v101
    %824 = vmatprep.subr.mxu0 0.0
    %825 = vmatpush1.msra.mxu0 0.0
    %826 = vmatprep.subr.mxu0 0.0
    %827 = vmatpush1.msra.mxu0 0.0
    %828 = vmatprep.subr.mxu0 0.0
    %829 = vmatpush1.msra.mxu0 0.0
    %830 = vmatprep.subr.mxu0 0.0
    %831 = vmatpush1.msra.mxu0 0.0
    %832 = vmatprep.subr.mxu0 0.0
    %833 = vmatpush1.msra.mxu0 0.0
    %834 = vmatprep.subr.mxu0 0.0
    %835 = vmatpush1.msra.mxu0 0.0
    %836 = vmatprep.subr.mxu0 0.0
    %837 = vmatpush1.msra.mxu0 0.0
    %838 = vmatprep.subr.mxu0 0.0
    %839 = vmatpush1.msra.mxu0 0.0
    %840 = vmatprep.subr.mxu0 0.0
    %841 = vmatpush1.msra.mxu0 0.0
    %842 = vmatprep.subr.mxu0 0.0
    %843 = vmatpush1.msra.mxu0 0.0
    %844 = vmatprep.subr.mxu0 0.0
    %845 = vmatpush1.msra.mxu0 0.0
    %846 = vmatprep.subr.mxu0 0.0
    %847 = vmatpush1.msra.mxu0 0.0
    %848 = vmatprep.subr.mxu0 0.0
    %849 = vmatpush1.msra.mxu0 0.0
    %850 = vmatprep.subr.mxu0 0.0
    %851 = vmatpush1.msra.mxu0 0.0
    %852 = vmatprep.subr.mxu0 0.0
    %853 = vmatpush1.msra.mxu0 0.0
    %854 = vmatprep.subr.mxu0 0.0
    %855 = vmatpush1.msra.mxu0 0.0
    %856 = vmatprep.subr.mxu0 0.0
    %857 = vmatpush1.msra.mxu0 0.0
    %858 = vmatprep.subr.mxu0 0.0
    %859 = vmatpush1.msra.mxu0 0.0
    %860 = vmatprep.subr.mxu0 0.0
    %861 = vmatpush1.msra.mxu0 0.0
    %862 = vmatprep.subr.mxu0 0.0
    %863 = vmatpush1.msra.mxu0 0.0
    %864 = vmatprep.subr.mxu0 0.0
    %865 = vmatpush1.msra.mxu0 0.0
    %866 = vmatprep.subr.mxu0 0.0
    %867 = vmatpush1.msra.mxu0 0.0
    %868 = vmatprep.subr.mxu0 0.0
    %869 = vmatpush1.msra.mxu0 0.0
    %870 = vmatprep.subr.mxu0 0.0
    %871 = vmatpush1.msra.mxu0 0.0
    %872 = vmatprep.subr.mxu0 0.0
    %873 = vmatpush1.msra.mxu0 0.0
    %874 = vmatprep.subr.mxu0 0.0
    %875 = vmatpush1.msra.mxu0 0.0
    %876 = vmatprep.subr.mxu0 0.0
    %877 = vmatpush1.msra.mxu0 0.0
    %878 = vmatprep.mubr.f32.mxu0 0.0
    %879 = vmatmul.mubr.f32.gmra.mrb[0].mxu0 %v812
    %v880 = vpop.f32.mrb[0].mxu0
    %v881 = vadd.f32 %v106, %v880
    %v882 = vpop.f32.mrb[0].mxu0
    %883 = vdwg.mxu0
    %v884 = vxor.u32 %v881, 2147483648
    %v885 = vmul.f32 %v884, 1.442695
    %v886 = vpow.pop %v885
    %v887 = vadd.f32 %v886, 1.0
    %v888 = vrcp.pop %v887
    %v889 = vmul.f32 1.0, %v888
    %891 = vrot.lane.b32.xlu0 %v881, 32
    %v892 = vpop.permute.xlu0 %891
    %v894 = vmul.f32 %v889, %v892
    %896 = vrot.lane.b32.xlu0 %v894, 64
    %v897 = vpop.permute.xlu0 %896
    %v899 = vadd.f32 %v881, %v897
    %v900 = vtanh.pop %v899
    %v901 = vsub.f32 1.0, %v889
    %903 = vrot.lane.b32.xlu0 %v900, 96
    %v904 = vpop.permute.xlu0 %903
    %v906 = vmul.f32 %v901, %v904
    %v907 = vmul.f32 %v889, %v683
    %v908 = vadd.f32 %v906, %v907
    %v909 = vsel %vm788, 1, 0
    %910 = vset.pattern.permute.xlu0 0
    %911 = vperm.xlu0 %910, %v909
    %v912 = vpop.permute.xlu0 %911
    %vm913 = vcmp.eq.s32.totalorder %v912, 1
    %v914 = vsel %vm913, %v908, %v683
    %916 = vrot.lane.b32.xlu0 %v787, 96
    %v917 = vpop.permute.xlu0 %916
    %v919 = vsel %vm95, %v917, %v914
    %v921 = vsel %vm226, %v919, 0
    %923 = vmatprep.subr.mxu0 0.0
    %924 = vmatpush1.msra.mxu0 %v213
    %925 = vmatprep.subr.mxu0 0.0
    %926 = vmatpush1.msra.mxu0 %v214
    %927 = vmatprep.subr.mxu0 0.0
    %928 = vmatpush1.msra.mxu0 %v215
    %929 = vmatprep.subr.mxu0 0.0
    %930 = vmatpush1.msra.mxu0 %v216
    %931 = vmatprep.subr.mxu0 0.0
    %932 = vmatpush1.msra.mxu0 %v217
    %933 = vmatprep.subr.mxu0 0.0
    %934 = vmatpush1.msra.mxu0 %v218
    %935 = vmatprep.subr.mxu0 0.0
    %936 = vmatpush1.msra.mxu0 %v219
    %937 = vmatprep.subr.mxu0 0.0
    %938 = vmatpush1.msra.mxu0 %v220
    %939 = vmatprep.subr.mxu0 0.0
    %940 = vmatpush1.msra.mxu0 0.0
    %941 = vmatprep.subr.mxu0 0.0
    %942 = vmatpush1.msra.mxu0 0.0
    %943 = vmatprep.subr.mxu0 0.0
    %944 = vmatpush1.msra.mxu0 0.0
    %945 = vmatprep.subr.mxu0 0.0
    %946 = vmatpush1.msra.mxu0 0.0
    %947 = vmatprep.subr.mxu0 0.0
    %948 = vmatpush1.msra.mxu0 0.0
    %949 = vmatprep.subr.mxu0 0.0
    %950 = vmatpush1.msra.mxu0 0.0
    %951 = vmatprep.subr.mxu0 0.0
    %952 = vmatpush1.msra.mxu0 0.0
    %953 = vmatprep.subr.mxu0 0.0
    %954 = vmatpush1.msra.mxu0 0.0
    %955 = vmatprep.subr.mxu0 0.0
    %956 = vmatpush1.msra.mxu0 0.0
    %957 = vmatprep.subr.mxu0 0.0
    %958 = vmatpush1.msra.mxu0 0.0
    %959 = vmatprep.subr.mxu0 0.0
    %960 = vmatpush1.msra.mxu0 0.0
    %961 = vmatprep.subr.mxu0 0.0
    %962 = vmatpush1.msra.mxu0 0.0
    %963 = vmatprep.subr.mxu0 0.0
    %964 = vmatpush1.msra.mxu0 0.0
    %965 = vmatprep.subr.mxu0 0.0
    %966 = vmatpush1.msra.mxu0 0.0
    %967 = vmatprep.subr.mxu0 0.0
    %968 = vmatpush1.msra.mxu0 0.0
    %969 = vmatprep.subr.mxu0 0.0
    %970 = vmatpush1.msra.mxu0 0.0
    %971 = vmatprep.subr.mxu0 0.0
    %972 = vmatpush1.msra.mxu0 0.0
    %973 = vmatprep.subr.mxu0 0.0
    %974 = vmatpush1.msra.mxu0 0.0
    %975 = vmatprep.subr.mxu0 0.0
    %976 = vmatpush1.msra.mxu0 0.0
    %977 = vmatprep.subr.mxu0 0.0
    %978 = vmatpush1.msra.mxu0 0.0
    %979 = vmatprep.subr.mxu0 0.0
    %980 = vmatpush1.msra.mxu0 0.0
    %981 = vmatprep.subr.mxu0 0.0
    %982 = vmatpush1.msra.mxu0 0.0
    %983 = vmatprep.subr.mxu0 0.0
    %984 = vmatpush1.msra.mxu0 0.0
    %985 = vmatprep.subr.mxu0 0.0
    %986 = vmatpush1.msra.mxu0 0.0
    %987 = vmatprep.mubr.f32.mxu0 0.0
    %988 = vmatmul.mubr.f32.gmra.mrb[0].mxu0 %v921
    %v989 = vpop.f32.mrb[0].mxu0
    %v990 = vadd.f32 %v225, %v989
    %v991 = vpop.f32.mrb[0].mxu0
    %992 = vdwg.mxu0
    %v993 = vxor.u32 %v990, 2147483648
    %v994 = vmul.f32 %v993, 1.442695
    %v995 = vpow.pop %v994
    %v996 = vadd.f32 %v995, 1.0
    %v997 = vrcp.pop %v996
    %v998 = vmul.f32 1.0, %v997
    %1000 = vrot.lane.b32.xlu0 %v990, 32
    %v1001 = vpop.permute.xlu0 %1000
    %v1003 = vmul.f32 %v998, %v1001
    %1005 = vrot.lane.b32.xlu0 %v1003, 64
    %v1006 = vpop.permute.xlu0 %1005
    %v1008 = vadd.f32 %v990, %v1006
    %v1009 = vtanh.pop %v1008
    %v1010 = vsub.f32 1.0, %v998
    %1012 = vrot.lane.b32.xlu0 %v1009, 96
    %v1013 = vpop.permute.xlu0 %1012
    %v1015 = vmul.f32 %v1010, %v1013
    %v1016 = vmul.f32 %v998, %v787
    %v1017 = vadd.f32 %v1015, %v1016
    %v1018 = vsel %vm913, %v1017, %v787
    %vm1019 = vcmp.gt.f32.partialorder %v73, 4.0
    %v1020 = vld [vmem:[#allocation2 + $0x4] sm:$0x1]
    %v1021 = vld [vmem:[#allocation2 + $0xc] sm:$0x1]
    %v1022 = vld [vmem:[#allocation2 + $0x14] sm:$0x1]
    %v1023 = vld [vmem:[#allocation2 + $0x1c] sm:$0x1]
    %1025 = vrot.lane.b32.xlu0 %v914, 96
    %v1026 = vpop.permute.xlu0 %1025
    %v1032 = vrot.slane %v1021, 7
    %v1033 = vsel %vm84, %v1032, %v1020
    %v1034 = vrot.slane %v1022, 6
    %v1035 = vsel %vm87, %v1034, %v1033
    %v1036 = vrot.slane %v1023, 5
    %v1037 = vsel %vm90, %v1036, %v1035
    %1038 = vrot.lane.b32.xlu0 %v1037, 32
    %v1039 = vpop.permute.xlu0 %1038
    %v1041 = vsel %vm95, %v1026, %v1039
    %v1043 = vsel %vm107, %v1041, 0
    %1045 = vmatprep.subr.mxu0 0.0
    %1046 = vmatpush1.msra.mxu0 %v97
    %1047 = vmatprep.subr.mxu0 0.0
    %1048 = vmatpush1.msra.mxu0 %v98
    %1049 = vmatprep.subr.mxu0 0.0
    %1050 = vmatpush1.msra.mxu0 %v99
    %1051 = vmatprep.subr.mxu0 0.0
    %1052 = vmatpush1.msra.mxu0 %v100
    %1053 = vmatprep.subr.mxu0 0.0
    %1054 = vmatpush1.msra.mxu0 %v101
    %1055 = vmatprep.subr.mxu0 0.0
    %1056 = vmatpush1.msra.mxu0 0.0
    %1057 = vmatprep.subr.mxu0 0.0
    %1058 = vmatpush1.msra.mxu0 0.0
    %1059 = vmatprep.subr.mxu0 0.0
    %1060 = vmatpush1.msra.mxu0 0.0
    %1061 = vmatprep.subr.mxu0 0.0
    %1062 = vmatpush1.msra.mxu0 0.0
    %1063 = vmatprep.subr.mxu0 0.0
    %1064 = vmatpush1.msra.mxu0 0.0
    %1065 = vmatprep.subr.mxu0 0.0
    %1066 = vmatpush1.msra.mxu0 0.0
    %1067 = vmatprep.subr.mxu0 0.0
    %1068 = vmatpush1.msra.mxu0 0.0
    %1069 = vmatprep.subr.mxu0 0.0
    %1070 = vmatpush1.msra.mxu0 0.0
    %1071 = vmatprep.subr.mxu0 0.0
    %1072 = vmatpush1.msra.mxu0 0.0
    %1073 = vmatprep.subr.mxu0 0.0
    %1074 = vmatpush1.msra.mxu0 0.0
    %1075 = vmatprep.subr.mxu0 0.0
    %1076 = vmatpush1.msra.mxu0 0.0
    %1077 = vmatprep.subr.mxu0 0.0
    %1078 = vmatpush1.msra.mxu0 0.0
    %1079 = vmatprep.subr.mxu0 0.0
    %1080 = vmatpush1.msra.mxu0 0.0
    %1081 = vmatprep.subr.mxu0 0.0
    %1082 = vmatpush1.msra.mxu0 0.0
    %1083 = vmatprep.subr.mxu0 0.0
    %1084 = vmatpush1.msra.mxu0 0.0
    %1085 = vmatprep.subr.mxu0 0.0
    %1086 = vmatpush1.msra.mxu0 0.0
    %1087 = vmatprep.subr.mxu0 0.0
    %1088 = vmatpush1.msra.mxu0 0.0
    %1089 = vmatprep.subr.mxu0 0.0
    %1090 = vmatpush1.msra.mxu0 0.0
    %1091 = vmatprep.subr.mxu0 0.0
    %1092 = vmatpush1.msra.mxu0 0.0
    %1093 = vmatprep.subr.mxu0 0.0
    %1094 = vmatpush1.msra.mxu0 0.0
    %1095 = vmatprep.subr.mxu0 0.0
    %1096 = vmatpush1.msra.mxu0 0.0
    %1097 = vmatprep.subr.mxu0 0.0
    %1098 = vmatpush1.msra.mxu0 0.0
    %1099 = vmatprep.subr.mxu0 0.0
    %1100 = vmatpush1.msra.mxu0 0.0
    %1101 = vmatprep.subr.mxu0 0.0
    %1102 = vmatpush1.msra.mxu0 0.0
    %1103 = vmatprep.subr.mxu0 0.0
    %1104 = vmatpush1.msra.mxu0 0.0
    %1105 = vmatprep.subr.mxu0 0.0
    %1106 = vmatpush1.msra.mxu0 0.0
    %1107 = vmatprep.subr.mxu0 0.0
    %1108 = vmatpush1.msra.mxu0 0.0
    %1109 = vmatprep.mubr.f32.mxu0 0.0
    %1110 = vmatmul.mubr.f32.gmra.mrb[0].mxu0 %v1043
    %v1111 = vpop.f32.mrb[0].mxu0
    %v1112 = vadd.f32 %v106, %v1111
    %v1113 = vpop.f32.mrb[0].mxu0
    %1114 = vdwg.mxu0
    %v1115 = vxor.u32 %v1112, 2147483648
    %v1116 = vmul.f32 %v1115, 1.442695
    %v1117 = vpow.pop %v1116
    %v1118 = vadd.f32 %v1117, 1.0
    %v1119 = vrcp.pop %v1118
    %v1120 = vmul.f32 1.0, %v1119
    %1122 = vrot.lane.b32.xlu0 %v1112, 32
    %v1123 = vpop.permute.xlu0 %1122
    %v1125 = vmul.f32 %v1120, %v1123
    %1127 = vrot.lane.b32.xlu0 %v1125, 64
    %v1128 = vpop.permute.xlu0 %1127
    %v1130 = vadd.f32 %v1112, %v1128
    %v1131 = vtanh.pop %v1130
    %v1132 = vsub.f32 1.0, %v1120
    %1134 = vrot.lane.b32.xlu0 %v1131, 96
    %v1135 = vpop.permute.xlu0 %1134
    %v1137 = vmul.f32 %v1132, %v1135
    %v1138 = vmul.f32 %v1120, %v914
    %v1139 = vadd.f32 %v1137, %v1138
    %v1140 = vsel %vm1019, 1, 0
    %1141 = vset.pattern.permute.xlu0 0
    %1142 = vperm.xlu0 %1141, %v1140
    %v1143 = vpop.permute.xlu0 %1142
    %vm1144 = vcmp.eq.s32.totalorder %v1143, 1
    %v1145 = vsel %vm1144, %v1139, %v914
    %1147 = vrot.lane.b32.xlu0 %v1018, 96
    %v1148 = vpop.permute.xlu0 %1147
    %v1150 = vsel %vm95, %v1148, %v1145
    %v1152 = vsel %vm226, %v1150, 0
    %1154 = vmatprep.subr.mxu0 0.0
    %1155 = vmatpush1.msra.mxu0 %v213
    %1156 = vmatprep.subr.mxu0 0.0
    %1157 = vmatpush1.msra.mxu0 %v214
    %1158 = vmatprep.subr.mxu0 0.0
    %1159 = vmatpush1.msra.mxu0 %v215
    %1160 = vmatprep.subr.mxu0 0.0
    %1161 = vmatpush1.msra.mxu0 %v216
    %1162 = vmatprep.subr.mxu0 0.0
    %1163 = vmatpush1.msra.mxu0 %v217
    %1164 = vmatprep.subr.mxu0 0.0
    %1165 = vmatpush1.msra.mxu0 %v218
    %1166 = vmatprep.subr.mxu0 0.0
    %1167 = vmatpush1.msra.mxu0 %v219
    %1168 = vmatprep.subr.mxu0 0.0
    %1169 = vmatpush1.msra.mxu0 %v220
    %1170 = vmatprep.subr.mxu0 0.0
    %1171 = vmatpush1.msra.mxu0 0.0
    %1172 = vmatprep.subr.mxu0 0.0
    %1173 = vmatpush1.msra.mxu0 0.0
    %1174 = vmatprep.subr.mxu0 0.0
    %1175 = vmatpush1.msra.mxu0 0.0
    %1176 = vmatprep.subr.mxu0 0.0
    %1177 = vmatpush1.msra.mxu0 0.0
    %1178 = vmatprep.subr.mxu0 0.0
    %1179 = vmatpush1.msra.mxu0 0.0
    %1180 = vmatprep.subr.mxu0 0.0
    %1181 = vmatpush1.msra.mxu0 0.0
    %1182 = vmatprep.subr.mxu0 0.0
    %1183 = vmatpush1.msra.mxu0 0.0
    %1184 = vmatprep.subr.mxu0 0.0
    %1185 = vmatpush1.msra.mxu0 0.0
    %1186 = vmatprep.subr.mxu0 0.0
    %1187 = vmatpush1.msra.mxu0 0.0
    %1188 = vmatprep.subr.mxu0 0.0
    %1189 = vmatpush1.msra.mxu0 0.0
    %1190 = vmatprep.subr.mxu0 0.0
    %1191 = vmatpush1.msra.mxu0 0.0
    %1192 = vmatprep.subr.mxu0 0.0
    %1193 = vmatpush1.msra.mxu0 0.0
    %1194 = vmatprep.subr.mxu0 0.0
    %1195 = vmatpush1.msra.mxu0 0.0
    %1196 = vmatprep.subr.mxu0 0.0
    %1197 = vmatpush1.msra.mxu0 0.0
    %1198 = vmatprep.subr.mxu0 0.0
    %1199 = vmatpush1.msra.mxu0 0.0
    %1200 = vmatprep.subr.mxu0 0.0
    %1201 = vmatpush1.msra.mxu0 0.0
    %1202 = vmatprep.subr.mxu0 0.0
    %1203 = vmatpush1.msra.mxu0 0.0
    %1204 = vmatprep.subr.mxu0 0.0
    %1205 = vmatpush1.msra.mxu0 0.0
    %1206 = vmatprep.subr.mxu0 0.0
    %1207 = vmatpush1.msra.mxu0 0.0
    %1208 = vmatprep.subr.mxu0 0.0
    %1209 = vmatpush1.msra.mxu0 0.0
    %1210 = vmatprep.subr.mxu0 0.0
    %1211 = vmatpush1.msra.mxu0 0.0
    %1212 = vmatprep.subr.mxu0 0.0
    %1213 = vmatpush1.msra.mxu0 0.0
    %1214 = vmatprep.subr.mxu0 0.0
    %1215 = vmatpush1.msra.mxu0 0.0
    %1216 = vmatprep.subr.mxu0 0.0
    %1217 = vmatpush1.msra.mxu0 0.0
    %1218 = vmatprep.mubr.f32.mxu0 0.0
    %1219 = vmatmul.mubr.f32.gmra.mrb[0].mxu0 %v1152
    %v1220 = vpop.f32.mrb[0].mxu0
    %v1221 = vadd.f32 %v225, %v1220
    %v1222 = vpop.f32.mrb[0].mxu0
    %1223 = vdwg.mxu0
    %v1224 = vxor.u32 %v1221, 2147483648
    %v1225 = vmul.f32 %v1224, 1.442695
    %v1226 = vpow.pop %v1225
    %v1227 = vadd.f32 %v1226, 1.0
    %v1228 = vrcp.pop %v1227
    %v1229 = vmul.f32 1.0, %v1228
    %1231 = vrot.lane.b32.xlu0 %v1221, 32
    %v1232 = vpop.permute.xlu0 %1231
    %v1234 = vmul.f32 %v1229, %v1232
    %1236 = vrot.lane.b32.xlu0 %v1234, 64
    %v1237 = vpop.permute.xlu0 %1236
    %v1239 = vadd.f32 %v1221, %v1237
    %v1240 = vtanh.pop %v1239
    %v1241 = vsub.f32 1.0, %v1229
    %1243 = vrot.lane.b32.xlu0 %v1240, 96
    %v1244 = vpop.permute.xlu0 %1243
    %v1246 = vmul.f32 %v1241, %v1244
    %v1247 = vmul.f32 %v1229, %v1018
    %v1248 = vadd.f32 %v1246, %v1247
    %v1249 = vsel %vm1144, %v1248, %v1018
    %vm1250 = vcmp.gt.f32.partialorder %v73, 5.0
    %v1251 = vld [vmem:[#allocation2 + $0x5] sm:$0x1]
    %v1252 = vld [vmem:[#allocation2 + $0xd] sm:$0x1]
    %v1253 = vld [vmem:[#allocation2 + $0x15] sm:$0x1]
    %v1254 = vld [vmem:[#allocation2 + $0x1d] sm:$0x1]
    %1256 = vrot.lane.b32.xlu0 %v1145, 96
    %v1257 = vpop.permute.xlu0 %1256
    %v1263 = vrot.slane %v1252, 7
    %v1264 = vsel %vm84, %v1263, %v1251
    %v1265 = vrot.slane %v1253, 6
    %v1266 = vsel %vm87, %v1265, %v1264
    %v1267 = vrot.slane %v1254, 5
    %v1268 = vsel %vm90, %v1267, %v1266
    %1269 = vrot.lane.b32.xlu0 %v1268, 32
    %v1270 = vpop.permute.xlu0 %1269
    %v1272 = vsel %vm95, %v1257, %v1270
    %v1274 = vsel %vm107, %v1272, 0
    %1276 = vmatprep.subr.mxu0 0.0
    %1277 = vmatpush1.msra.mxu0 %v97
    %1278 = vmatprep.subr.mxu0 0.0
    %1279 = vmatpush1.msra.mxu0 %v98
    %1280 = vmatprep.subr.mxu0 0.0
    %1281 = vmatpush1.msra.mxu0 %v99
    %1282 = vmatprep.subr.mxu0 0.0
    %1283 = vmatpush1.msra.mxu0 %v100
    %1284 = vmatprep.subr.mxu0 0.0
    %1285 = vmatpush1.msra.mxu0 %v101
    %1286 = vmatprep.subr.mxu0 0.0
    %1287 = vmatpush1.msra.mxu0 0.0
    %1288 = vmatprep.subr.mxu0 0.0
    %1289 = vmatpush1.msra.mxu0 0.0
    %1290 = vmatprep.subr.mxu0 0.0
    %1291 = vmatpush1.msra.mxu0 0.0
    %1292 = vmatprep.subr.mxu0 0.0
    %1293 = vmatpush1.msra.mxu0 0.0
    %1294 = vmatprep.subr.mxu0 0.0
    %1295 = vmatpush1.msra.mxu0 0.0
    %1296 = vmatprep.subr.mxu0 0.0
    %1297 = vmatpush1.msra.mxu0 0.0
    %1298 = vmatprep.subr.mxu0 0.0
    %1299 = vmatpush1.msra.mxu0 0.0
    %1300 = vmatprep.subr.mxu0 0.0
    %1301 = vmatpush1.msra.mxu0 0.0
    %1302 = vmatprep.subr.mxu0 0.0
    %1303 = vmatpush1.msra.mxu0 0.0
    %1304 = vmatprep.subr.mxu0 0.0
    %1305 = vmatpush1.msra.mxu0 0.0
    %1306 = vmatprep.subr.mxu0 0.0
    %1307 = vmatpush1.msra.mxu0 0.0
    %1308 = vmatprep.subr.mxu0 0.0
    %1309 = vmatpush1.msra.mxu0 0.0
    %1310 = vmatprep.subr.mxu0 0.0
    %1311 = vmatpush1.msra.mxu0 0.0
    %1312 = vmatprep.subr.mxu0 0.0
    %1313 = vmatpush1.msra.mxu0 0.0
    %1314 = vmatprep.subr.mxu0 0.0
    %1315 = vmatpush1.msra.mxu0 0.0
    %1316 = vmatprep.subr.mxu0 0.0
    %1317 = vmatpush1.msra.mxu0 0.0
    %1318 = vmatprep.subr.mxu0 0.0
    %1319 = vmatpush1.msra.mxu0 0.0
    %1320 = vmatprep.subr.mxu0 0.0
    %1321 = vmatpush1.msra.mxu0 0.0
    %1322 = vmatprep.subr.mxu0 0.0
    %1323 = vmatpush1.msra.mxu0 0.0
    %1324 = vmatprep.subr.mxu0 0.0
    %1325 = vmatpush1.msra.mxu0 0.0
    %1326 = vmatprep.subr.mxu0 0.0
    %1327 = vmatpush1.msra.mxu0 0.0
    %1328 = vmatprep.subr.mxu0 0.0
    %1329 = vmatpush1.msra.mxu0 0.0
    %1330 = vmatprep.subr.mxu0 0.0
    %1331 = vmatpush1.msra.mxu0 0.0
    %1332 = vmatprep.subr.mxu0 0.0
    %1333 = vmatpush1.msra.mxu0 0.0
    %1334 = vmatprep.subr.mxu0 0.0
    %1335 = vmatpush1.msra.mxu0 0.0
    %1336 = vmatprep.subr.mxu0 0.0
    %1337 = vmatpush1.msra.mxu0 0.0
    %1338 = vmatprep.subr.mxu0 0.0
    %1339 = vmatpush1.msra.mxu0 0.0
    %1340 = vmatprep.mubr.f32.mxu0 0.0
    %1341 = vmatmul.mubr.f32.gmra.mrb[0].mxu0 %v1274
    %v1342 = vpop.f32.mrb[0].mxu0
    %v1343 = vadd.f32 %v106, %v1342
    %v1344 = vpop.f32.mrb[0].mxu0
    %1345 = vdwg.mxu0
    %v1346 = vxor.u32 %v1343, 2147483648
    %v1347 = vmul.f32 %v1346, 1.442695
    %v1348 = vpow.pop %v1347
    %v1349 = vadd.f32 %v1348, 1.0
    %v1350 = vrcp.pop %v1349
    %v1351 = vmul.f32 1.0, %v1350
    %1353 = vrot.lane.b32.xlu0 %v1343, 32
    %v1354 = vpop.permute.xlu0 %1353
    %v1356 = vmul.f32 %v1351, %v1354
    %1358 = vrot.lane.b32.xlu0 %v1356, 64
    %v1359 = vpop.permute.xlu0 %1358
    %v1361 = vadd.f32 %v1343, %v1359
    %v1362 = vtanh.pop %v1361
    %v1363 = vsub.f32 1.0, %v1351
    %1365 = vrot.lane.b32.xlu0 %v1362, 96
    %v1366 = vpop.permute.xlu0 %1365
    %v1368 = vmul.f32 %v1363, %v1366
    %v1369 = vmul.f32 %v1351, %v1145
    %v1370 = vadd.f32 %v1368, %v1369
    %v1371 = vsel %vm1250, 1, 0
    %1372 = vset.pattern.permute.xlu0 0
    %1373 = vperm.xlu0 %1372, %v1371
    %v1374 = vpop.permute.xlu0 %1373
    %vm1375 = vcmp.eq.s32.totalorder %v1374, 1
    %v1376 = vsel %vm1375, %v1370, %v1145
    %1378 = vrot.lane.b32.xlu0 %v1249, 96
    %v1379 = vpop.permute.xlu0 %1378
    %v1381 = vsel %vm95, %v1379, %v1376
    %v1383 = vsel %vm226, %v1381, 0
    %1385 = vmatprep.subr.mxu0 0.0
    %1386 = vmatpush1.msra.mxu0 %v213
    %1387 = vmatprep.subr.mxu0 0.0
    %1388 = vmatpush1.msra.mxu0 %v214
    %1389 = vmatprep.subr.mxu0 0.0
    %1390 = vmatpush1.msra.mxu0 %v215
    %1391 = vmatprep.subr.mxu0 0.0
    %1392 = vmatpush1.msra.mxu0 %v216
    %1393 = vmatprep.subr.mxu0 0.0
    %1394 = vmatpush1.msra.mxu0 %v217
    %1395 = vmatprep.subr.mxu0 0.0
    %1396 = vmatpush1.msra.mxu0 %v218
    %1397 = vmatprep.subr.mxu0 0.0
    %1398 = vmatpush1.msra.mxu0 %v219
    %1399 = vmatprep.subr.mxu0 0.0
    %1400 = vmatpush1.msra.mxu0 %v220
    %1401 = vmatprep.subr.mxu0 0.0
    %1402 = vmatpush1.msra.mxu0 0.0
    %1403 = vmatprep.subr.mxu0 0.0
    %1404 = vmatpush1.msra.mxu0 0.0
    %1405 = vmatprep.subr.mxu0 0.0
    %1406 = vmatpush1.msra.mxu0 0.0
    %1407 = vmatprep.subr.mxu0 0.0
    %1408 = vmatpush1.msra.mxu0 0.0
    %1409 = vmatprep.subr.mxu0 0.0
    %1410 = vmatpush1.msra.mxu0 0.0
    %1411 = vmatprep.subr.mxu0 0.0
    %1412 = vmatpush1.msra.mxu0 0.0
    %1413 = vmatprep.subr.mxu0 0.0
    %1414 = vmatpush1.msra.mxu0 0.0
    %1415 = vmatprep.subr.mxu0 0.0
    %1416 = vmatpush1.msra.mxu0 0.0
    %1417 = vmatprep.subr.mxu0 0.0
    %1418 = vmatpush1.msra.mxu0 0.0
    %1419 = vmatprep.subr.mxu0 0.0
    %1420 = vmatpush1.msra.mxu0 0.0
    %1421 = vmatprep.subr.mxu0 0.0
    %1422 = vmatpush1.msra.mxu0 0.0
    %1423 = vmatprep.subr.mxu0 0.0
    %1424 = vmatpush1.msra.mxu0 0.0
    %1425 = vmatprep.subr.mxu0 0.0
    %1426 = vmatpush1.msra.mxu0 0.0
    %1427 = vmatprep.subr.mxu0 0.0
    %1428 = vmatpush1.msra.mxu0 0.0
    %1429 = vmatprep.subr.mxu0 0.0
    %1430 = vmatpush1.msra.mxu0 0.0
    %1431 = vmatprep.subr.mxu0 0.0
    %1432 = vmatpush1.msra.mxu0 0.0
    %1433 = vmatprep.subr.mxu0 0.0
    %1434 = vmatpush1.msra.mxu0 0.0
    %1435 = vmatprep.subr.mxu0 0.0
    %1436 = vmatpush1.msra.mxu0 0.0
    %1437 = vmatprep.subr.mxu0 0.0
    %1438 = vmatpush1.msra.mxu0 0.0
    %1439 = vmatprep.subr.mxu0 0.0
    %1440 = vmatpush1.msra.mxu0 0.0
    %1441 = vmatprep.subr.mxu0 0.0
    %1442 = vmatpush1.msra.mxu0 0.0
    %1443 = vmatprep.subr.mxu0 0.0
    %1444 = vmatpush1.msra.mxu0 0.0
    %1445 = vmatprep.subr.mxu0 0.0
    %1446 = vmatpush1.msra.mxu0 0.0
    %1447 = vmatprep.subr.mxu0 0.0
    %1448 = vmatpush1.msra.mxu0 0.0
    %1449 = vmatprep.mubr.f32.mxu0 0.0
    %1450 = vmatmul.mubr.f32.gmra.mrb[0].mxu0 %v1383
    %v1451 = vpop.f32.mrb[0].mxu0
    %v1452 = vadd.f32 %v225, %v1451
    %v1453 = vpop.f32.mrb[0].mxu0
    %1454 = vdwg.mxu0
    %v1455 = vxor.u32 %v1452, 2147483648
    %v1456 = vmul.f32 %v1455, 1.442695
    %v1457 = vpow.pop %v1456
    %v1458 = vadd.f32 %v1457, 1.0
    %v1459 = vrcp.pop %v1458
    %v1460 = vmul.f32 1.0, %v1459
    %1462 = vrot.lane.b32.xlu0 %v1452, 32
    %v1463 = vpop.permute.xlu0 %1462
    %v1465 = vmul.f32 %v1460, %v1463
    %1467 = vrot.lane.b32.xlu0 %v1465, 64
    %v1468 = vpop.permute.xlu0 %1467
    %v1470 = vadd.f32 %v1452, %v1468
    %v1471 = vtanh.pop %v1470
    %v1472 = vsub.f32 1.0, %v1460
    %1474 = vrot.lane.b32.xlu0 %v1471, 96
    %v1475 = vpop.permute.xlu0 %1474
    %v1477 = vmul.f32 %v1472, %v1475
    %v1478 = vmul.f32 %v1460, %v1249
    %v1479 = vadd.f32 %v1477, %v1478
    %v1480 = vsel %vm1375, %v1479, %v1249
    %vm1481 = vcmp.gt.f32.partialorder %v73, 6.0
    %v1482 = vld [vmem:[#allocation2 + $0x6] sm:$0x1]
    %v1483 = vld [vmem:[#allocation2 + $0xe] sm:$0x1]
    %v1484 = vld [vmem:[#allocation2 + $0x16] sm:$0x1]
    %v1485 = vld [vmem:[#allocation2 + $0x1e] sm:$0x1]
    %1487 = vrot.lane.b32.xlu0 %v1376, 96
    %v1488 = vpop.permute.xlu0 %1487
    %v1494 = vrot.slane %v1483, 7
    %v1495 = vsel %vm84, %v1494, %v1482
    %v1496 = vrot.slane %v1484, 6
    %v1497 = vsel %vm87, %v1496, %v1495
    %v1498 = vrot.slane %v1485, 5
    %v1499 = vsel %vm90, %v1498, %v1497
    %1500 = vrot.lane.b32.xlu0 %v1499, 32
    %v1501 = vpop.permute.xlu0 %1500
    %v1503 = vsel %vm95, %v1488, %v1501
    %v1505 = vsel %vm107, %v1503, 0
    %1507 = vmatprep.subr.mxu0 0.0
    %1508 = vmatpush1.msra.mxu0 %v97
    %1509 = vmatprep.subr.mxu0 0.0
    %1510 = vmatpush1.msra.mxu0 %v98
    %1511 = vmatprep.subr.mxu0 0.0
    %1512 = vmatpush1.msra.mxu0 %v99
    %1513 = vmatprep.subr.mxu0 0.0
    %1514 = vmatpush1.msra.mxu0 %v100
    %1515 = vmatprep.subr.mxu0 0.0
    %1516 = vmatpush1.msra.mxu0 %v101
    %1517 = vmatprep.subr.mxu0 0.0
    %1518 = vmatpush1.msra.mxu0 0.0
    %1519 = vmatprep.subr.mxu0 0.0
    %1520 = vmatpush1.msra.mxu0 0.0
    %1521 = vmatprep.subr.mxu0 0.0
    %1522 = vmatpush1.msra.mxu0 0.0
    %1523 = vmatprep.subr.mxu0 0.0
    %1524 = vmatpush1.msra.mxu0 0.0
    %1525 = vmatprep.subr.mxu0 0.0
    %1526 = vmatpush1.msra.mxu0 0.0
    %1527 = vmatprep.subr.mxu0 0.0
    %1528 = vmatpush1.msra.mxu0 0.0
    %1529 = vmatprep.subr.mxu0 0.0
    %1530 = vmatpush1.msra.mxu0 0.0
    %1531 = vmatprep.subr.mxu0 0.0
    %1532 = vmatpush1.msra.mxu0 0.0
    %1533 = vmatprep.subr.mxu0 0.0
    %1534 = vmatpush1.msra.mxu0 0.0
    %1535 = vmatprep.subr.mxu0 0.0
    %1536 = vmatpush1.msra.mxu0 0.0
    %1537 = vmatprep.subr.mxu0 0.0
    %1538 = vmatpush1.msra.mxu0 0.0
    %1539 = vmatprep.subr.mxu0 0.0
    %1540 = vmatpush1.msra.mxu0 0.0
    %1541 = vmatprep.subr.mxu0 0.0
    %1542 = vmatpush1.msra.mxu0 0.0
    %1543 = vmatprep.subr.mxu0 0.0
    %1544 = vmatpush1.msra.mxu0 0.0
    %1545 = vmatprep.subr.mxu0 0.0
    %1546 = vmatpush1.msra.mxu0 0.0
    %1547 = vmatprep.subr.mxu0 0.0
    %1548 = vmatpush1.msra.mxu0 0.0
    %1549 = vmatprep.subr.mxu0 0.0
    %1550 = vmatpush1.msra.mxu0 0.0
    %1551 = vmatprep.subr.mxu0 0.0
    %1552 = vmatpush1.msra.mxu0 0.0
    %1553 = vmatprep.subr.mxu0 0.0
    %1554 = vmatpush1.msra.mxu0 0.0
    %1555 = vmatprep.subr.mxu0 0.0
    %1556 = vmatpush1.msra.mxu0 0.0
    %1557 = vmatprep.subr.mxu0 0.0
    %1558 = vmatpush1.msra.mxu0 0.0
    %1559 = vmatprep.subr.mxu0 0.0
    %1560 = vmatpush1.msra.mxu0 0.0
    %1561 = vmatprep.subr.mxu0 0.0
    %1562 = vmatpush1.msra.mxu0 0.0
    %1563 = vmatprep.subr.mxu0 0.0
    %1564 = vmatpush1.msra.mxu0 0.0
    %1565 = vmatprep.subr.mxu0 0.0
    %1566 = vmatpush1.msra.mxu0 0.0
    %1567 = vmatprep.subr.mxu0 0.0
    %1568 = vmatpush1.msra.mxu0 0.0
    %1569 = vmatprep.subr.mxu0 0.0
    %1570 = vmatpush1.msra.mxu0 0.0
    %1571 = vmatprep.mubr.f32.mxu0 0.0
    %1572 = vmatmul.mubr.f32.gmra.mrb[0].mxu0 %v1505
    %v1573 = vpop.f32.mrb[0].mxu0
    %v1574 = vadd.f32 %v106, %v1573
    %v1575 = vpop.f32.mrb[0].mxu0
    %1576 = vdwg.mxu0
    %v1577 = vxor.u32 %v1574, 2147483648
    %v1578 = vmul.f32 %v1577, 1.442695
    %v1579 = vpow.pop %v1578
    %v1580 = vadd.f32 %v1579, 1.0
    %v1581 = vrcp.pop %v1580
    %v1582 = vmul.f32 1.0, %v1581
    %1584 = vrot.lane.b32.xlu0 %v1574, 32
    %v1585 = vpop.permute.xlu0 %1584
    %v1587 = vmul.f32 %v1582, %v1585
    %1589 = vrot.lane.b32.xlu0 %v1587, 64
    %v1590 = vpop.permute.xlu0 %1589
    %v1592 = vadd.f32 %v1574, %v1590
    %v1593 = vtanh.pop %v1592
    %v1594 = vsub.f32 1.0, %v1582
    %1596 = vrot.lane.b32.xlu0 %v1593, 96
    %v1597 = vpop.permute.xlu0 %1596
    %v1599 = vmul.f32 %v1594, %v1597
    %v1600 = vmul.f32 %v1582, %v1376
    %v1601 = vadd.f32 %v1599, %v1600
    %v1602 = vsel %vm1481, 1, 0
    %1603 = vset.pattern.permute.xlu0 0
    %1604 = vperm.xlu0 %1603, %v1602
    %v1605 = vpop.permute.xlu0 %1604
    %vm1606 = vcmp.eq.s32.totalorder %v1605, 1
    %v1607 = vsel %vm1606, %v1601, %v1376
    %1609 = vrot.lane.b32.xlu0 %v1480, 96
    %v1610 = vpop.permute.xlu0 %1609
    %v1612 = vsel %vm95, %v1610, %v1607
    %v1614 = vsel %vm226, %v1612, 0
    %1616 = vmatprep.subr.mxu0 0.0
    %1617 = vmatpush1.msra.mxu0 %v213
    %1618 = vmatprep.subr.mxu0 0.0
    %1619 = vmatpush1.msra.mxu0 %v214
    %1620 = vmatprep.subr.mxu0 0.0
    %1621 = vmatpush1.msra.mxu0 %v215
    %1622 = vmatprep.subr.mxu0 0.0
    %1623 = vmatpush1.msra.mxu0 %v216
    %1624 = vmatprep.subr.mxu0 0.0
    %1625 = vmatpush1.msra.mxu0 %v217
    %1626 = vmatprep.subr.mxu0 0.0
    %1627 = vmatpush1.msra.mxu0 %v218
    %1628 = vmatprep.subr.mxu0 0.0
    %1629 = vmatpush1.msra.mxu0 %v219
    %1630 = vmatprep.subr.mxu0 0.0
    %1631 = vmatpush1.msra.mxu0 %v220
    %1632 = vmatprep.subr.mxu0 0.0
    %1633 = vmatpush1.msra.mxu0 0.0
    %1634 = vmatprep.subr.mxu0 0.0
    %1635 = vmatpush1.msra.mxu0 0.0
    %1636 = vmatprep.subr.mxu0 0.0
    %1637 = vmatpush1.msra.mxu0 0.0
    %1638 = vmatprep.subr.mxu0 0.0
    %1639 = vmatpush1.msra.mxu0 0.0
    %1640 = vmatprep.subr.mxu0 0.0
    %1641 = vmatpush1.msra.mxu0 0.0
    %1642 = vmatprep.subr.mxu0 0.0
    %1643 = vmatpush1.msra.mxu0 0.0
    %1644 = vmatprep.subr.mxu0 0.0
    %1645 = vmatpush1.msra.mxu0 0.0
    %1646 = vmatprep.subr.mxu0 0.0
    %1647 = vmatpush1.msra.mxu0 0.0
    %1648 = vmatprep.subr.mxu0 0.0
    %1649 = vmatpush1.msra.mxu0 0.0
    %1650 = vmatprep.subr.mxu0 0.0
    %1651 = vmatpush1.msra.mxu0 0.0
    %1652 = vmatprep.subr.mxu0 0.0
    %1653 = vmatpush1.msra.mxu0 0.0
    %1654 = vmatprep.subr.mxu0 0.0
    %1655 = vmatpush1.msra.mxu0 0.0
    %1656 = vmatprep.subr.mxu0 0.0
    %1657 = vmatpush1.msra.mxu0 0.0
    %1658 = vmatprep.subr.mxu0 0.0
    %1659 = vmatpush1.msra.mxu0 0.0
    %1660 = vmatprep.subr.mxu0 0.0
    %1661 = vmatpush1.msra.mxu0 0.0
    %1662 = vmatprep.subr.mxu0 0.0
    %1663 = vmatpush1.msra.mxu0 0.0
    %1664 = vmatprep.subr.mxu0 0.0
    %1665 = vmatpush1.msra.mxu0 0.0
    %1666 = vmatprep.subr.mxu0 0.0
    %1667 = vmatpush1.msra.mxu0 0.0
    %1668 = vmatprep.subr.mxu0 0.0
    %1669 = vmatpush1.msra.mxu0 0.0
    %1670 = vmatprep.subr.mxu0 0.0
    %1671 = vmatpush1.msra.mxu0 0.0
    %1672 = vmatprep.subr.mxu0 0.0
    %1673 = vmatpush1.msra.mxu0 0.0
    %1674 = vmatprep.subr.mxu0 0.0
    %1675 = vmatpush1.msra.mxu0 0.0
    %1676 = vmatprep.subr.mxu0 0.0
    %1677 = vmatpush1.msra.mxu0 0.0
    %1678 = vmatprep.subr.mxu0 0.0
    %1679 = vmatpush1.msra.mxu0 0.0
    %1680 = vmatprep.mubr.f32.mxu0 0.0
    %1681 = vmatmul.mubr.f32.gmra.mrb[0].mxu0 %v1614
    %v1682 = vpop.f32.mrb[0].mxu0
    %v1683 = vadd.f32 %v225, %v1682
    %v1684 = vpop.f32.mrb[0].mxu0
    %1685 = vdwg.mxu0
    %v1686 = vxor.u32 %v1683, 2147483648
    %v1687 = vmul.f32 %v1686, 1.442695
    %v1688 = vpow.pop %v1687
    %v1689 = vadd.f32 %v1688, 1.0
    %v1690 = vrcp.pop %v1689
    %v1691 = vmul.f32 1.0, %v1690
    %1693 = vrot.lane.b32.xlu0 %v1683, 32
    %v1694 = vpop.permute.xlu0 %1693
    %v1696 = vmul.f32 %v1691, %v1694
    %1698 = vrot.lane.b32.xlu0 %v1696, 64
    %v1699 = vpop.permute.xlu0 %1698
    %v1701 = vadd.f32 %v1683, %v1699
    %v1702 = vtanh.pop %v1701
    %v1703 = vsub.f32 1.0, %v1691
    %1705 = vrot.lane.b32.xlu0 %v1702, 96
    %v1706 = vpop.permute.xlu0 %1705
    %v1708 = vmul.f32 %v1703, %v1706
    %v1709 = vmul.f32 %v1691, %v1480
    %v1710 = vadd.f32 %v1708, %v1709
    %v1711 = vsel %vm1606, %v1710, %v1480
    %vm1712 = vcmp.gt.f32.partialorder %v73, 7.0
    %v1713 = vld [vmem:[#allocation2 + $0x7] sm:$0x1]
    %v1714 = vld [vmem:[#allocation2 + $0xf] sm:$0x1]
    %v1715 = vld [vmem:[#allocation2 + $0x17] sm:$0x1]
    %v1716 = vld [vmem:[#allocation2 + $0x1f] sm:$0x1]
    %1718 = vrot.lane.b32.xlu0 %v1607, 96
    %v1719 = vpop.permute.xlu0 %1718
    %v1725 = vrot.slane %v1714, 7
    %v1726 = vsel %vm84, %v1725, %v1713
    %v1727 = vrot.slane %v1715, 6
    %v1728 = vsel %vm87, %v1727, %v1726
    %v1729 = vrot.slane %v1716, 5
    %v1730 = vsel %vm90, %v1729, %v1728
    %1731 = vrot.lane.b32.xlu0 %v1730, 32
    %v1732 = vpop.permute.xlu0 %1731
    %v1734 = vsel %vm95, %v1719, %v1732
    %v1736 = vsel %vm107, %v1734, 0
    %1738 = vmatprep.subr.mxu0 0.0
    %1739 = vmatpush1.msra.mxu0 %v97
    %1740 = vmatprep.subr.mxu0 0.0
    %1741 = vmatpush1.msra.mxu0 %v98
    %1742 = vmatprep.subr.mxu0 0.0
    %1743 = vmatpush1.msra.mxu0 %v99
    %1744 = vmatprep.subr.mxu0 0.0
    %1745 = vmatpush1.msra.mxu0 %v100
    %1746 = vmatprep.subr.mxu0 0.0
    %1747 = vmatpush1.msra.mxu0 %v101
    %1748 = vmatprep.subr.mxu0 0.0
    %1749 = vmatpush1.msra.mxu0 0.0
    %1750 = vmatprep.subr.mxu0 0.0
    %1751 = vmatpush1.msra.mxu0 0.0
    %1752 = vmatprep.subr.mxu0 0.0
    %1753 = vmatpush1.msra.mxu0 0.0
    %1754 = vmatprep.subr.mxu0 0.0
    %1755 = vmatpush1.msra.mxu0 0.0
    %1756 = vmatprep.subr.mxu0 0.0
    %1757 = vmatpush1.msra.mxu0 0.0
    %1758 = vmatprep.subr.mxu0 0.0
    %1759 = vmatpush1.msra.mxu0 0.0
    %1760 = vmatprep.subr.mxu0 0.0
    %1761 = vmatpush1.msra.mxu0 0.0
    %1762 = vmatprep.subr.mxu0 0.0
    %1763 = vmatpush1.msra.mxu0 0.0
    %1764 = vmatprep.subr.mxu0 0.0
    %1765 = vmatpush1.msra.mxu0 0.0
    %1766 = vmatprep.subr.mxu0 0.0
    %1767 = vmatpush1.msra.mxu0 0.0
    %1768 = vmatprep.subr.mxu0 0.0
    %1769 = vmatpush1.msra.mxu0 0.0
    %1770 = vmatprep.subr.mxu0 0.0
    %1771 = vmatpush1.msra.mxu0 0.0
    %1772 = vmatprep.subr.mxu0 0.0
    %1773 = vmatpush1.msra.mxu0 0.0
    %1774 = vmatprep.subr.mxu0 0.0
    %1775 = vmatpush1.msra.mxu0 0.0
    %1776 = vmatprep.subr.mxu0 0.0
    %1777 = vmatpush1.msra.mxu0 0.0
    %1778 = vmatprep.subr.mxu0 0.0
    %1779 = vmatpush1.msra.mxu0 0.0
    %1780 = vmatprep.subr.mxu0 0.0
    %1781 = vmatpush1.msra.mxu0 0.0
    %1782 = vmatprep.subr.mxu0 0.0
    %1783 = vmatpush1.msra.mxu0 0.0
    %1784 = vmatprep.subr.mxu0 0.0
    %1785 = vmatpush1.msra.mxu0 0.0
    %1786 = vmatprep.subr.mxu0 0.0
    %1787 = vmatpush1.msra.mxu0 0.0
    %1788 = vmatprep.subr.mxu0 0.0
    %1789 = vmatpush1.msra.mxu0 0.0
    %1790 = vmatprep.subr.mxu0 0.0
    %1791 = vmatpush1.msra.mxu0 0.0
    %1792 = vmatprep.subr.mxu0 0.0
    %1793 = vmatpush1.msra.mxu0 0.0
    %1794 = vmatprep.subr.mxu0 0.0
    %1795 = vmatpush1.msra.mxu0 0.0
    %1796 = vmatprep.subr.mxu0 0.0
    %1797 = vmatpush1.msra.mxu0 0.0
    %1798 = vmatprep.subr.mxu0 0.0
    %1799 = vmatpush1.msra.mxu0 0.0
    %1800 = vmatprep.subr.mxu0 0.0
    %1801 = vmatpush1.msra.mxu0 0.0
    %1802 = vmatprep.mubr.f32.mxu0 0.0
    %1803 = vmatmul.mubr.f32.gmra.mrb[0].mxu0 %v1736
    %v1804 = vpop.f32.mrb[0].mxu0
    %v1805 = vadd.f32 %v106, %v1804
    %v1806 = vpop.f32.mrb[0].mxu0
    %1807 = vdwg.mxu0
    %v1808 = vxor.u32 %v1805, 2147483648
    %v1809 = vmul.f32 %v1808, 1.442695
    %v1810 = vpow.pop %v1809
    %v1811 = vadd.f32 %v1810, 1.0
    %v1812 = vrcp.pop %v1811
    %v1813 = vmul.f32 1.0, %v1812
    %1815 = vrot.lane.b32.xlu0 %v1805, 32
    %v1816 = vpop.permute.xlu0 %1815
    %v1818 = vmul.f32 %v1813, %v1816
    %1820 = vrot.lane.b32.xlu0 %v1818, 64
    %v1821 = vpop.permute.xlu0 %1820
    %v1823 = vadd.f32 %v1805, %v1821
    %v1824 = vtanh.pop %v1823
    %v1825 = vsub.f32 1.0, %v1813
    %1827 = vrot.lane.b32.xlu0 %v1824, 96
    %v1828 = vpop.permute.xlu0 %1827
    %v1830 = vmul.f32 %v1825, %v1828
    %v1831 = vmul.f32 %v1813, %v1607
    %v1832 = vadd.f32 %v1830, %v1831
    %v1833 = vsel %vm1712, 1, 0
    %1834 = vset.pattern.permute.xlu0 0
    %1835 = vperm.xlu0 %1834, %v1833
    %v1836 = vpop.permute.xlu0 %1835
    %vm1837 = vcmp.eq.s32.totalorder %v1836, 1
    %v1838 = vsel %vm1837, %v1832, %v1607
    %1840 = vrot.lane.b32.xlu0 %v1711, 96
    %v1841 = vpop.permute.xlu0 %1840
    %v1843 = vsel %vm95, %v1841, %v1838
    %v1845 = vsel %vm226, %v1843, 0
    %1847 = vmatprep.subr.mxu0 0.0
    %1848 = vmatpush1.msra.mxu0 %v213
    %1849 = vmatprep.subr.mxu0 0.0
    %1850 = vmatpush1.msra.mxu0 %v214
    %1851 = vmatprep.subr.mxu0 0.0
    %1852 = vmatpush1.msra.mxu0 %v215
    %1853 = vmatprep.subr.mxu0 0.0
    %1854 = vmatpush1.msra.mxu0 %v216
    %1855 = vmatprep.subr.mxu0 0.0
    %1856 = vmatpush1.msra.mxu0 %v217
    %1857 = vmatprep.subr.mxu0 0.0
    %1858 = vmatpush1.msra.mxu0 %v218
    %1859 = vmatprep.subr.mxu0 0.0
    %1860 = vmatpush1.msra.mxu0 %v219
    %1861 = vmatprep.subr.mxu0 0.0
    %1862 = vmatpush1.msra.mxu0 %v220
    %1863 = vmatprep.subr.mxu0 0.0
    %1864 = vmatpush1.msra.mxu0 0.0
    %1865 = vmatprep.subr.mxu0 0.0
    %1866 = vmatpush1.msra.mxu0 0.0
    %1867 = vmatprep.subr.mxu0 0.0
    %1868 = vmatpush1.msra.mxu0 0.0
    %1869 = vmatprep.subr.mxu0 0.0
    %1870 = vmatpush1.msra.mxu0 0.0
    %1871 = vmatprep.subr.mxu0 0.0
    %1872 = vmatpush1.msra.mxu0 0.0
    %1873 = vmatprep.subr.mxu0 0.0
    %1874 = vmatpush1.msra.mxu0 0.0
    %1875 = vmatprep.subr.mxu0 0.0
    %1876 = vmatpush1.msra.mxu0 0.0
    %1877 = vmatprep.subr.mxu0 0.0
    %1878 = vmatpush1.msra.mxu0 0.0
    %1879 = vmatprep.subr.mxu0 0.0
    %1880 = vmatpush1.msra.mxu0 0.0
    %1881 = vmatprep.subr.mxu0 0.0
    %1882 = vmatpush1.msra.mxu0 0.0
    %1883 = vmatprep.subr.mxu0 0.0
    %1884 = vmatpush1.msra.mxu0 0.0
    %1885 = vmatprep.subr.mxu0 0.0
    %1886 = vmatpush1.msra.mxu0 0.0
    %1887 = vmatprep.subr.mxu0 0.0
    %1888 = vmatpush1.msra.mxu0 0.0
    %1889 = vmatprep.subr.mxu0 0.0
    %1890 = vmatpush1.msra.mxu0 0.0
    %1891 = vmatprep.subr.mxu0 0.0
    %1892 = vmatpush1.msra.mxu0 0.0
    %1893 = vmatprep.subr.mxu0 0.0
    %1894 = vmatpush1.msra.mxu0 0.0
    %1895 = vmatprep.subr.mxu0 0.0
    %1896 = vmatpush1.msra.mxu0 0.0
    %1897 = vmatprep.subr.mxu0 0.0
    %1898 = vmatpush1.msra.mxu0 0.0
    %1899 = vmatprep.subr.mxu0 0.0
    %1900 = vmatpush1.msra.mxu0 0.0
    %1901 = vmatprep.subr.mxu0 0.0
    %1902 = vmatpush1.msra.mxu0 0.0
    %1903 = vmatprep.subr.mxu0 0.0
    %1904 = vmatpush1.msra.mxu0 0.0
    %1905 = vmatprep.subr.mxu0 0.0
    %1906 = vmatpush1.msra.mxu0 0.0
    %1907 = vmatprep.subr.mxu0 0.0
    %1908 = vmatpush1.msra.mxu0 0.0
    %1909 = vmatprep.subr.mxu0 0.0
    %1910 = vmatpush1.msra.mxu0 0.0
    %1911 = vmatprep.mubr.f32.mxu0 0.0
    %1912 = vmatmul.mubr.f32.gmra.mrb[0].mxu0 %v1845
    %v1913 = vpop.f32.mrb[0].mxu0
    %v1914 = vadd.f32 %v225, %v1913
    %v1915 = vpop.f32.mrb[0].mxu0
    %1916 = vdwg.mxu0
    %v1917 = vxor.u32 %v1914, 2147483648
    %v1918 = vmul.f32 %v1917, 1.442695
    %v1919 = vpow.pop %v1918
    %v1920 = vadd.f32 %v1919, 1.0
    %v1921 = vrcp.pop %v1920
    %v1922 = vmul.f32 1.0, %v1921
    %1924 = vrot.lane.b32.xlu0 %v1914, 32
    %v1925 = vpop.permute.xlu0 %1924
    %v1927 = vmul.f32 %v1922, %v1925
    %1929 = vrot.lane.b32.xlu0 %v1927, 64
    %v1930 = vpop.permute.xlu0 %1929
    %v1932 = vadd.f32 %v1914, %v1930
    %v1933 = vtanh.pop %v1932
    %v1934 = vsub.f32 1.0, %v1922
    %1936 = vrot.lane.b32.xlu0 %v1933, 96
    %v1937 = vpop.permute.xlu0 %1936
    %v1939 = vmul.f32 %v1934, %v1937
    %v1940 = vmul.f32 %v1922, %v1711
    %v1941 = vadd.f32 %v1939, %v1940
    %v1942 = vsel %vm1837, %v1941, %v1711
    %vm1943 = vcmask 519424
    %v1944 = vsel %vm1943, %v1942, 0.0
    %v1945 = vrot.slane %v1944, 4
    %v1946 = vadd.f32 %v1944, %v1945
    %v1947 = vrot.slane %v1946, 2
    %v1948 = vadd.f32 %v1946, %v1947
    %v1949 = vrot.slane %v1948, 1
    %v1950 = vadd.f32 %v1948, %v1949
    %v1951 = vrcp.pop 4.0
    %v1952 = vmul.f32 %v1950, %v1951
    %v1953 = vsub.f32 %v1942, %v1952
    %v1954 = vmul.f32 %v1953, %v1953
    %v1955 = vsel %vm1943, %v1954, 0.0
    %v1956 = vrot.slane %v1955, 4
    %v1957 = vadd.f32 %v1955, %v1956
    %v1958 = vrot.slane %v1957, 2
    %v1959 = vadd.f32 %v1957, %v1958
    %v1960 = vrot.slane %v1959, 1
    %v1961 = vadd.f32 %v1959, %v1960
    %v1962 = vmul.f32 %v1961, %v1951
    %v1963 = vld [vmem:[#allocation8 + $0x2] sm:$0x1]
    %v1964 = vld [vmem:[#allocation8 + $0x3] sm:$0x1]
    %v1965 = vadd.f32 %v1962, 1e-05
    %v1966 = vrsqrt.pop %v1965
    %v1967 = vmul.f32 %v1953, %v1966
    %v1968 = vlaneseq
    %v1969 = vshrl.u32 %v1968, 7
    %v1970 = vsub.s32 0, %v1969
    %v1971 = vrot.slane %v1963, %v1970
    %1973 = vrot.lane.b32.xlu0 %v1971, 32
    %v1974 = vpop.permute.xlu0 %1973
    %v1976 = vmul.f32 %v1967, %v1974
    %v1977 = vlaneseq
    %v1978 = vshrl.u32 %v1977, 7
    %v1979 = vsub.s32 0, %v1978
    %v1980 = vrot.slane %v1964, %v1979
    %1982 = vrot.lane.b32.xlu0 %v1980, 32
    %v1983 = vpop.permute.xlu0 %1982
    %v1985 = vadd.f32 %v1976, %v1983
    %v1986 = vld [vmem:[#allocation8 + $0x10] sm:$0xf]
    %v1987 = vld [vmem:[#allocation8 + $0x18] sm:$0xff]
    %v1988 = vld [vmem:[#allocation8 + $0x20] sm:$0xff]
    %v1989 = vld [vmem:[#allocation8 + $0x28] sm:$0xff]
    %v1990 = vld [vmem:[#allocation8 + $0x30] sm:$0xff]
    %v1991 = vld [vmem:[#allocation8 + $0x38] sm:$0xff]
    %v1992 = vld [vmem:[#allocation8 + $0x4] sm:$0x1]
    %vm1993 = vcmask 64512
    %v1995 = vsel %vm1993, %v1986, 0
    %1997 = vmatprep.subr.mxu0 0.0
    %1998 = vmatpush1.msra.mxu0 %v1991
    %1999 = vmatprep.subr.mxu0 0.0
    %2000 = vmatpush1.msra.mxu0 0.0
    %2001 = vmatprep.subr.mxu0 0.0
    %2002 = vmatpush1.msra.mxu0 0.0
    %2003 = vmatprep.subr.mxu0 0.0
    %2004 = vmatpush1.msra.mxu0 0.0
    %2005 = vmatprep.subr.mxu0 0.0
    %2006 = vmatpush1.msra.mxu0 0.0
    %2007 = vmatprep.subr.mxu0 0.0
    %2008 = vmatpush1.msra.mxu0 0.0
    %2009 = vmatprep.subr.mxu0 0.0
    %2010 = vmatpush1.msra.mxu0 0.0
    %2011 = vmatprep.subr.mxu0 0.0
    %2012 = vmatpush1.msra.mxu0 0.0
    %2013 = vmatprep.subr.mxu0 0.0
    %2014 = vmatpush1.msra.mxu0 0.0
    %2015 = vmatprep.subr.mxu0 0.0
    %2016 = vmatpush1.msra.mxu0 0.0
    %2017 = vmatprep.subr.mxu0 0.0
    %2018 = vmatpush1.msra.mxu0 0.0
    %2019 = vmatprep.subr.mxu0 0.0
    %2020 = vmatpush1.msra.mxu0 0.0
    %2021 = vmatprep.subr.mxu0 0.0
    %2022 = vmatpush1.msra.mxu0 0.0
    %2023 = vmatprep.subr.mxu0 0.0
    %2024 = vmatpush1.msra.mxu0 0.0
    %2025 = vmatprep.subr.mxu0 0.0
    %2026 = vmatpush1.msra.mxu0 0.0
    %2027 = vmatprep.subr.mxu0 0.0
    %2028 = vmatpush1.msra.mxu0 0.0
    %2029 = vmatprep.subr.mxu0 0.0
    %2030 = vmatpush1.msra.mxu0 0.0
    %2031 = vmatprep.subr.mxu0 0.0
    %2032 = vmatpush1.msra.mxu0 0.0
    %2033 = vmatprep.subr.mxu0 0.0
    %2034 = vmatpush1.msra.mxu0 0.0
    %2035 = vmatprep.subr.mxu0 0.0
    %2036 = vmatpush1.msra.mxu0 0.0
    %2037 = vmatprep.subr.mxu0 0.0
    %2038 = vmatpush1.msra.mxu0 0.0
    %2039 = vmatprep.subr.mxu0 0.0
    %2040 = vmatpush1.msra.mxu0 0.0
    %2041 = vmatprep.subr.mxu0 0.0
    %2042 = vmatpush1.msra.mxu0 0.0
    %2043 = vmatprep.subr.mxu0 0.0
    %2044 = vmatpush1.msra.mxu0 0.0
    %2045 = vmatprep.subr.mxu0 0.0
    %2046 = vmatpush1.msra.mxu0 0.0
    %2047 = vmatprep.subr.mxu0 0.0
    %2048 = vmatpush1.msra.mxu0 0.0
    %2049 = vmatprep.subr.mxu0 0.0
    %2050 = vmatpush1.msra.mxu0 0.0
    %2051 = vmatprep.subr.mxu0 0.0
    %2052 = vmatpush1.msra.mxu0 0.0
    %2053 = vmatprep.subr.mxu0 0.0
    %2054 = vmatpush1.msra.mxu0 0.0
    %2055 = vmatprep.subr.mxu0 0.0
    %2056 = vmatpush1.msra.mxu0 0.0
    %2057 = vmatprep.subr.mxu0 0.0
    %2058 = vmatpush1.msra.mxu0 0.0
    %2059 = vmatprep.subr.mxu0 0.0
    %2060 = vmatpush1.msra.mxu0 0.0
    %2061 = vmatprep.mubr.f32.mxu0 0.0
    %2062 = vmatmul.mubr.f32.gmra.mrb[0].mxu0 %v1995
    %v2063 = vpop.f32.mrb[0].mxu0
    %v2064 = vadd.f32 0.0, %v2063
    %v2065 = vpop.f32.mrb[0].mxu0
    %2066 = vdwg.mxu0
    %2068 = vrot.lane.b32.xlu0 %v1985, 96
    %v2069 = vpop.permute.xlu0 %2068
    %v2070 = vsel %vm95, %v2069, 0
    %2072 = vmatprep.subr.mxu0 0.0
    %2073 = vmatpush1.msra.mxu0 %v1987
    %2074 = vmatprep.subr.mxu0 0.0
    %2075 = vmatpush1.msra.mxu0 %v1988
    %2076 = vmatprep.subr.mxu0 0.0
    %2077 = vmatpush1.msra.mxu0 %v1989
    %2078 = vmatprep.subr.mxu0 0.0
    %2079 = vmatpush1.msra.mxu0 %v1990
    %2080 = vmatprep.subr.mxu0 0.0
    %2081 = vmatpush1.msra.mxu0 0.0
    %2082 = vmatprep.subr.mxu0 0.0
    %2083 = vmatpush1.msra.mxu0 0.0
    %2084 = vmatprep.subr.mxu0 0.0
    %2085 = vmatpush1.msra.mxu0 0.0
    %2086 = vmatprep.subr.mxu0 0.0
    %2087 = vmatpush1.msra.mxu0 0.0
    %2088 = vmatprep.subr.mxu0 0.0
    %2089 = vmatpush1.msra.mxu0 0.0
    %2090 = vmatprep.subr.mxu0 0.0
    %2091 = vmatpush1.msra.mxu0 0.0
    %2092 = vmatprep.subr.mxu0 0.0
    %2093 = vmatpush1.msra.mxu0 0.0
    %2094 = vmatprep.subr.mxu0 0.0
    %2095 = vmatpush1.msra.mxu0 0.0
    %2096 = vmatprep.subr.mxu0 0.0
    %2097 = vmatpush1.msra.mxu0 0.0
    %2098 = vmatprep.subr.mxu0 0.0
    %2099 = vmatpush1.msra.mxu0 0.0
    %2100 = vmatprep.subr.mxu0 0.0
    %2101 = vmatpush1.msra.mxu0 0.0
    %2102 = vmatprep.subr.mxu0 0.0
    %2103 = vmatpush1.msra.mxu0 0.0
    %2104 = vmatprep.subr.mxu0 0.0
    %2105 = vmatpush1.msra.mxu0 0.0
    %2106 = vmatprep.subr.mxu0 0.0
    %2107 = vmatpush1.msra.mxu0 0.0
    %2108 = vmatprep.subr.mxu0 0.0
    %2109 = vmatpush1.msra.mxu0 0.0
    %2110 = vmatprep.subr.mxu0 0.0
    %2111 = vmatpush1.msra.mxu0 0.0
    %2112 = vmatprep.subr.mxu0 0.0
    %2113 = vmatpush1.msra.mxu0 0.0
    %2114 = vmatprep.subr.mxu0 0.0
    %2115 = vmatpush1.msra.mxu0 0.0
    %2116 = vmatprep.subr.mxu0 0.0
    %2117 = vmatpush1.msra.mxu0 0.0
    %2118 = vmatprep.subr.mxu0 0.0
    %2119 = vmatpush1.msra.mxu0 0.0
    %2120 = vmatprep.subr.mxu0 0.0
    %2121 = vmatpush1.msra.mxu0 0.0
    %2122 = vmatprep.subr.mxu0 0.0
    %2123 = vmatpush1.msra.mxu0 0.0
    %2124 = vmatprep.subr.mxu0 0.0
    %2125 = vmatpush1.msra.mxu0 0.0
    %2126 = vmatprep.subr.mxu0 0.0
    %2127 = vmatpush1.msra.mxu0 0.0
    %2128 = vmatprep.subr.mxu0 0.0
    %2129 = vmatpush1.msra.mxu0 0.0
    %2130 = vmatprep.subr.mxu0 0.0
    %2131 = vmatpush1.msra.mxu0 0.0
    %2132 = vmatprep.subr.mxu0 0.0
    %2133 = vmatpush1.msra.mxu0 0.0
    %2134 = vmatprep.subr.mxu0 0.0
    %2135 = vmatpush1.msra.mxu0 0.0
    %2136 = vmatprep.mubr.f32.mxu0 0.0
    %2137 = vmatmul.mubr.f32.gmra.mrb[0].mxu0 %v2070
    %v2138 = vpop.f32.mrb[0].mxu0
    %v2139 = vadd.f32 %v2064, %v2138
    %v2140 = vpop.f32.mrb[0].mxu0
    %2141 = vdwg.mxu0
    %v2142 = vlaneseq
    %v2143 = vshrl.u32 %v2142, 7
    %v2144 = vsub.s32 0, %v2143
    %v2145 = vrot.slane %v1992, %v2144
    %v2146 = vadd.f32 %v2139, %v2145
    %vm2147 = vcmask 27648
    %2148 = vst.msk [vmem:[#allocation10] sm:$0xf] %vm2147, %v2146
    // Predicated region
    $region34: #{tpu_custom_call.1} parent=1 // pred_check
      _
    $region35: #{tpu_custom_call.1} parent=1 // pred_check_branch
      %2150 = sbr.rel (0) target = $region37
    $region36: #{tpu_custom_call.1} parent=1 // pred_region
      %s2152 = ssub.s32 64, 64
      %2153 = vsyncadd [#allocation4], %s2152
      %s2155 = sshll.u32 [#allocation10], 4
      %s2156 = int_to_ptr.vmem [resolvable:$true] %s2155
      %2158 = dma.vmem_to_hbm [thread:$0]  %s2156, 64, %s4, [#allocation4]
    $region37: #{tpu_custom_call.1} parent=1 // pred_fallthru
      _
    // Predicated region
    $region38: #{tpu_custom_call.1} parent=1 // pred_check
      _
    $region39: #{tpu_custom_call.1} parent=1 // pred_check_branch
      %2160 = sbr.rel (0) target = $region41
    $region40: #{tpu_custom_call.1} parent=1 // pred_region
      %2161 = dma.done [#allocation4], 64
    $region41: #{tpu_custom_call.1} parent=1 // pred_fallthru
      _
    %2162 = vsyncpa [#allocation3], 1
    %2163 = vsyncpa [#allocation6], 1
    %2164 = vsyncpa [#allocation9], 1
    %2165 = vsyncpa [#allocation4], 1

</llo_original>
